<compile_context>
chip_gen: v6e
topology: v6e:2x2x1
jax: 0.10.0
libtpu: 0.0.40
codegen_flags: <defaults>
</compile_context>

<pallas_src>
import functools

import jax
import jax.numpy as jnp
from jax import lax
from jax.experimental import pallas as pl
from jax.experimental.pallas import tpu as pltpu

BN_EPS = 1e-5
LEAKY_SLOPE = 0.01              # PyTorch nn.LeakyReLU default negative_slope
LANE = 128                      # TPU lane width; channel padding target
VMEM_LIMIT = 32 * 1024 * 1024   # explicit scoped-VMEM request (safe on v5e/v6e/v7x)


def _round_up(x, m):
    return (x + m - 1) // m * m


def _pick_tile_m(m, cap=1024):
    """Largest divisor of m that is <= cap and a multiple of 8 (or m itself)."""
    t = min(m, cap)
    while t > 1:
        if m % t == 0 and (t % 8 == 0 or t == m):
            return t
        t -= 1
    return m


# --------------------------- pass 1: conv + stats ----------------------------
def _conv_stats_kernel(x_top_ref, x_mid_ref, x_bot_ref, w_ref,
                       y_ref, sum_ref, sq_ref,
                       acc_sum, acc_sq, *, out_w):
    """One image row of Conv3x3 (no bias) + per-channel sum / sum-of-squares.

    x_*_ref : (1, 1, W+2, Cp_in) bf16   padded input rows h, h+1, h+2
    w_ref   : (9*Cp_in, Cp_out)  bf16   patch-matmul weights (VMEM resident)
    y_ref   : (1, 1, W, Cp_out)  f32    raw conv output row
    sum/sq  : (1, Cp_out)        f32    global per-channel stats (written last)
    """
    first = (pl.program_id(0) == 0) & (pl.program_id(1) == 0)
    last = ((pl.program_id(0) == pl.num_programs(0) - 1) &
            (pl.program_id(1) == pl.num_programs(1) - 1))

    @pl.when(first)
    def _():
        acc_sum[...] = jnp.zeros_like(acc_sum)
        acc_sq[...] = jnp.zeros_like(acc_sq)

    # Build the (W, 9*Cp_in) patch matrix in VMEM from the three halo rows.
    # Upcast to f32 before the unaligned sublane slices, then back to bf16
    # (exact round-trip) so the MXU still sees bf16 operands.
    patches = []
    for row_ref in (x_top_ref, x_mid_ref, x_bot_ref):
        row = row_ref[0, 0].astype(jnp.float32)              # (W+2, Cp_in)
        for dx in range(3):
            patches.append(row[dx:dx + out_w, :])             # (W, Cp_in)
    a = jnp.concatenate(patches, axis=1).astype(jnp.bfloat16)  # (W, 9*Cp_in)

    acc = jnp.dot(a, w_ref[...], preferred_element_type=jnp.float32)  # (W, Cp_out)

    y_ref[0, 0] = acc
    acc_sum[...] += jnp.sum(acc, axis=0, keepdims=True)
    acc_sq[...] += jnp.sum(acc * acc, axis=0, keepdims=True)

    @pl.when(last)
    def _():
        sum_ref[...] = acc_sum[...]
        sq_ref[...] = acc_sq[...]


# ----------------------- pass 2: normalize + LeakyReLU -----------------------
def _bn_lrelu_kernel(y_ref, scale_ref, shift_ref, o_ref):
    y = y_ref[...] * scale_ref[...] + shift_ref[...]
    o_ref[...] = jnp.where(y >= 0, y, LEAKY_SLOPE * y).astype(o_ref.dtype)


def _conv_bn_lrelu_stage(xp, wmat, gamma_p, beta_p, *, out_dtype):
    """One fused Conv3x3(pad=1, no bias) -> BN(train) -> LeakyReLU stage.

    xp      : (N, H+2, W+2, Cp_in) bf16  spatially pre-padded, channel-padded NHWC
    wmat    : (9*Cp_in, Cp_out)    bf16  patch-matmul weights (zero in padded slots)
    gamma_p, beta_p : (1, Cp_out)  f32   BN affine (zero in padded channels)
    returns : (N, H, W, Cp_out) out_dtype, channels-last; padded channels stay 0.
    """
    N, Hp, Wp, Cp_in = xp.shape
    H, W = Hp - 2, Wp - 2
    Cp_out = wmat.shape[1]

    def row_spec(dy):
        # Row-block of 1 => block index == element row index, so "+dy" expresses
        # the 3x3 halo without materializing shifted copies in HBM.
        return pl.BlockSpec((1, 1, Wp, Cp_in), lambda n, h, d=dy: (n, h + d, 0, 0))

    kernel = functools.partial(_conv_stats_kernel, out_w=W)
    y_conv, ssum, ssq = pl.pallas_call(
        kernel,
        out_shape=(jax.ShapeDtypeStruct((N, H, W, Cp_out), jnp.float32),
                   jax.ShapeDtypeStruct((1, Cp_out), jnp.float32),
                   jax.ShapeDtypeStruct((1, Cp_out), jnp.float32)),
        grid_spec=pltpu.PrefetchScalarGridSpec(
            num_scalar_prefetch=0,
            grid=(N, H),
            in_specs=[row_spec(0), row_spec(1), row_spec(2),
                      pl.BlockSpec((9 * Cp_in, Cp_out), lambda n, h: (0, 0))],
            out_specs=[pl.BlockSpec((1, 1, W, Cp_out), lambda n, h: (n, h, 0, 0)),
                       pl.BlockSpec((1, Cp_out), lambda n, h: (0, 0)),
                       pl.BlockSpec((1, Cp_out), lambda n, h: (0, 0))],
            scratch_shapes=[pltpu.VMEM((1, Cp_out), jnp.float32),
                            pltpu.VMEM((1, Cp_out), jnp.float32)]),
        compiler_params=pltpu.CompilerParams(
            dimension_semantics=("arbitrary", "arbitrary"),
            vmem_limit_bytes=VMEM_LIMIT),
    )(xp, xp, xp, wmat)

    # BN finalize (once per channel, outside the per-tile loop): pass 2 becomes
    # a single fused multiply-add per element.
    cnt = jnp.float32(N * H * W)
    mean = ssum / cnt
    var = jnp.maximum(ssq / cnt - mean * mean, 0.0)        # biased variance (train)
    scale = gamma_p * lax.rsqrt(var + BN_EPS)
    shift = beta_p - mean * scale

    M = N * H * W
    tile_m = _pick_tile_m(M)
    out2d = pl.pallas_call(
        _bn_lrelu_kernel,
        out_shape=jax.ShapeDtypeStruct((M, Cp_out), out_dtype),
        grid_spec=pltpu.PrefetchScalarGridSpec(
            num_scalar_prefetch=0,
            grid=(M // tile_m,),
            in_specs=[pl.BlockSpec((tile_m, Cp_out), lambda i: (i, 0)),
                      pl.BlockSpec((1, Cp_out), lambda i: (0, 0)),
                      pl.BlockSpec((1, Cp_out), lambda i: (0, 0))],
            out_specs=pl.BlockSpec((tile_m, Cp_out), lambda i: (i, 0))),
        compiler_params=pltpu.CompilerParams(
            dimension_semantics=("parallel",),
            vmem_limit_bytes=VMEM_LIMIT),
    )(y_conv.reshape(M, Cp_out), scale, shift)
    return out2d.reshape(N, H, W, Cp_out)


def _prep_stage_params(w, gamma, beta, cp_in):
    """Conv weight (Cout,Cin,3,3) -> (9*Cp_in, Cp_out) bf16 matmul weights,
    plus channel-padded BN affine params."""
    cout, cin = w.shape[0], w.shape[1]
    cp_out = _round_up(cout, LANE)
    wt = jnp.transpose(w, (2, 3, 1, 0))                             # (3,3,Cin,Cout)
    wt = jnp.pad(wt, ((0, 0), (0, 0), (0, cp_in - cin), (0, cp_out - cout)))
    wmat = wt.reshape(9 * cp_in, cp_out).astype(jnp.bfloat16)
    g = jnp.pad(gamma.astype(jnp.float32), (0, cp_out - cout)).reshape(1, cp_out)
    b = jnp.pad(beta.astype(jnp.float32), (0, cp_out - cout)).reshape(1, cp_out)
    return wmat, g, b, cp_out


@jax.jit
def double_conv(x_nchw, params):
    """DoubleConv forward. x: (N, Cin, H, W) NCHW f32 -> (N, Cout, H, W) f32.

    Conv biases (params['b1'], params['b2']) are intentionally unused: a bias
    added before train-mode BatchNorm is exactly cancelled by the mean
    subtraction, so dropping it saves DMA + VPU work with no semantic change.
    """
    n, cin, h, w = x_nchw.shape
    cp0 = _round_up(cin, LANE)

    # Boundary-only layout change: NCHW -> NHWC (channels-last kept thereafter).
    x = jnp.transpose(x_nchw, (0, 2, 3, 1))
    x = jnp.pad(x, ((0, 0), (1, 1), (1, 1), (0, cp0 - cin))).astype(jnp.bfloat16)

    w1m, g1, b1, cp1 = _prep_stage_params(params["w1"], params["g1"],
                                          params["beta1"], cp0)
    y = _conv_bn_lrelu_stage(x, w1m, g1, b1, out_dtype=jnp.bfloat16)

    # Stage-2 input: spatial halo pad only; channels already padded & lane-dense,
    # no NCHW transpose or im2col between the two stages.
    y = jnp.pad(y, ((0, 0), (1, 1), (1, 1), (0, 0)))
    w2m, g2, b2, _ = _prep_stage_params(params["w2"], params["g2"],
                                        params["beta2"], cp1)
    z = _conv_bn_lrelu_stage(y, w2m, g2, b2, out_dtype=jnp.float32)

    cout = params["w2"].shape[0]
    return jnp.transpose(z[..., :cout], (0, 3, 1, 2))


# ----------------------------- pure-JAX reference -----------------------------
def _ref_stage(x, w, b, g, beta):
    # Matches the kernel's numerics: bf16 MXU inputs, f32 accumulation, f32 BN.
    y = lax.conv_general_dilated(
        x.astype(jnp.bfloat16), w.astype(jnp.bfloat16),
        window_strides=(1, 1), padding=((1, 1), (1, 1)),
        dimension_numbers=("NCHW", "OIHW", "NCHW"),
        preferred_element_type=jnp.float32)
    y = y + b[None, :, None, None]               # cancelled by BN mean subtraction
    mean = jnp.mean(y, axis=(0, 2, 3), keepdims=True)
    var = jnp.mean((y - mean) ** 2, axis=(0, 2, 3), keepdims=True)
    y = (y - mean) * lax.rsqrt(var + BN_EPS)
    y = y * g[None, :, None, None] + beta[None, :, None, None]
    return jnp.where(y >= 0, y, LEAKY_SLOPE * y)


def double_conv_ref(x, p):
    y = _ref_stage(x, p["w1"], p["b1"], p["g1"], p["beta1"])
    return _ref_stage(y, p["w2"], p["b2"], p["g2"], p["beta2"])


if __name__ == "__main__":
    # Small shapes consistent with the module: DoubleConv(in=4, out=8), x=(2,4,16,16)
    in_channels, mid_channels, out_channels = 4, 8, 8
    N, H, W = 2, 16, 16

    key = jax.random.PRNGKey(0)
    k_x, k_w1, k_b1, k_w2, k_b2 = jax.random.split(key, 5)

    x = jax.random.normal(k_x, (N, in_channels, H, W), dtype=jnp.float32)

    fan_in1 = in_channels * 9
    fan_in2 = mid_channels * 9
    params = {
        "w1": jax.random.uniform(k_w1, (mid_channels, in_channels, 3, 3),
                                 minval=-1.0, maxval=1.0) / jnp.sqrt(fan_in1),
        "b1": jax.random.uniform(k_b1, (mid_channels,),
                                 minval=-1.0, maxval=1.0) / jnp.sqrt(fan_in1),
        "g1": jnp.ones((mid_channels,), jnp.float32),
        "beta1": jnp.zeros((mid_channels,), jnp.float32),
        "w2": jax.random.uniform(k_w2, (out_channels, mid_channels, 3, 3),
                                 minval=-1.0, maxval=1.0) / jnp.sqrt(fan_in2),
        "b2": jax.random.uniform(k_b2, (out_channels,),
                                 minval=-1.0, maxval=1.0) / jnp.sqrt(fan_in2),
        "g2": jnp.ones((out_channels,), jnp.float32),
        "beta2": jnp.zeros((out_channels,), jnp.float32),
    }

    out = jax.block_until_ready(double_conv(x, params))
    assert out.shape == (N, out_channels, H, W), out.shape

    ref = jax.block_until_ready(double_conv_ref(x, params))
    # bf16 MXU inputs + bf16 inter-stage activation => compare at bf16-level tol.
    assert jnp.allclose(out, ref, rtol=2e-2, atol=2e-2), \
        float(jnp.max(jnp.abs(out - ref)))

    print("KERNEL_OK")
</pallas_src>

<mosaic_0001>
module attributes {stable_mosaic.version = 11 : i64} {
  func.func @_conv_stats_kernel(%arg0: i32, %arg1: i32, %arg2: memref<1x1x18x128xbf16, #tpu.memory_space<vmem>>, %arg3: memref<1x1x18x128xbf16, #tpu.memory_space<vmem>>, %arg4: memref<1x1x18x128xbf16, #tpu.memory_space<vmem>>, %arg5: memref<1152x128xbf16, #tpu.memory_space<vmem>>, %arg6: memref<1x1x16x128xf32, #tpu.memory_space<vmem>>, %arg7: memref<1x128xf32, #tpu.memory_space<vmem>>, %arg8: memref<1x128xf32, #tpu.memory_space<vmem>>, %arg9: memref<1x128xf32, #tpu.memory_space<vmem>>, %arg10: memref<1x128xf32, #tpu.memory_space<vmem>>) attributes {dimension_semantics = [#tpu.dimension_semantics<arbitrary>, #tpu.dimension_semantics<arbitrary>], iteration_bounds = array<i64: 2, 16>, scalar_prefetch = 0 : i64, scratch_operands = 2 : i64, tpu.core_type = #tpu.core_type<tc>, window_params = [{transform_indices = @transform_0, window_bounds = array<i64: 1, 1, 18, 128>}, {transform_indices = @transform_1, window_bounds = array<i64: 1, 1, 18, 128>}, {transform_indices = @transform_2, window_bounds = array<i64: 1, 1, 18, 128>}, {pipeline_mode = #tpu.pipeline_mode<synchronous>, transform_indices = @transform_3, window_bounds = array<i64: 1152, 128>}, {transform_indices = @transform_4, window_bounds = array<i64: 1, 1, 16, 128>}, {pipeline_mode = #tpu.pipeline_mode<synchronous>, transform_indices = @transform_5, window_bounds = array<i64: 1, 128>}, {pipeline_mode = #tpu.pipeline_mode<synchronous>, transform_indices = @transform_6, window_bounds = array<i64: 1, 128>}]} {
    %c0_i32 = arith.constant 0 : i32
    %0 = arith.cmpi eq, %arg0, %c0_i32 : i32
    %c0_i32_0 = arith.constant 0 : i32
    %1 = arith.cmpi eq, %arg1, %c0_i32_0 : i32
    %2 = arith.andi %0, %1 : i1
    %c1_i32 = arith.constant 1 : i32
    %3 = arith.cmpi eq, %arg0, %c1_i32 : i32
    %c15_i32 = arith.constant 15 : i32
    %4 = arith.cmpi eq, %arg1, %c15_i32 : i32
    %5 = arith.andi %3, %4 : i1
    %6 = arith.extui %2 : i1 to i32
    %c0_i32_1 = arith.constant 0 : i32
    %7 = arith.cmpi ne, %6, %c0_i32_1 : i32
    scf.if %7 {
      %cst_30 = arith.constant 0.000000e+00 : f32
      %46 = vector.broadcast %cst_30 : f32 to vector<1x128xf32>
      %c0_31 = arith.constant 0 : index
      %c0_32 = arith.constant 0 : index
      %47 = vector.load %arg9[%c0_31, %c0_32] : memref<1x128xf32, #tpu.memory_space<vmem>>, vector<1x128xf32>
      tpu.vector_store %arg9[%c0_31, %c0_32], %46 {strides = array<i32>} : memref<1x128xf32, #tpu.memory_space<vmem>>, vector<1x128xf32>,
      %cst_33 = arith.constant 0.000000e+00 : f32
      %48 = vector.broadcast %cst_33 : f32 to vector<1x128xf32>
      %c0_34 = arith.constant 0 : index
      %c0_35 = arith.constant 0 : index
      %49 = vector.load %arg10[%c0_34, %c0_35] : memref<1x128xf32, #tpu.memory_space<vmem>>, vector<1x128xf32>
      tpu.vector_store %arg10[%c0_34, %c0_35], %48 {strides = array<i32>} : memref<1x128xf32, #tpu.memory_space<vmem>>, vector<1x128xf32>,
    } else {
    }
    %c0 = arith.constant 0 : index
    %c0_2 = arith.constant 0 : index
    %c0_3 = arith.constant 0 : index
    %c0_4 = arith.constant 0 : index
    %8 = vector.load %arg2[%c0, %c0_2, %c0_3, %c0_4] : memref<1x1x18x128xbf16, #tpu.memory_space<vmem>>, vector<1x1x18x128xbf16>
    %9 = vector.shape_cast %8 : vector<1x1x18x128xbf16> to vector<18x128xbf16>
    %10 = arith.extf %9 : vector<18x128xbf16> to vector<18x128xf32>
    %11 = vector.extract_strided_slice %10 {offsets = [0, 0], sizes = [16, 128], strides = [1, 1]} : vector<18x128xf32> to vector<16x128xf32>
    %12 = vector.extract_strided_slice %10 {offsets = [1, 0], sizes = [16, 128], strides = [1, 1]} : vector<18x128xf32> to vector<16x128xf32>
    %13 = vector.extract_strided_slice %10 {offsets = [2, 0], sizes = [16, 128], strides = [1, 1]} : vector<18x128xf32> to vector<16x128xf32>
    %c0_5 = arith.constant 0 : index
    %c0_6 = arith.constant 0 : index
    %c0_7 = arith.constant 0 : index
    %c0_8 = arith.constant 0 : index
    %14 = vector.load %arg3[%c0_5, %c0_6, %c0_7, %c0_8] : memref<1x1x18x128xbf16, #tpu.memory_space<vmem>>, vector<1x1x18x128xbf16>
    %15 = vector.shape_cast %14 : vector<1x1x18x128xbf16> to vector<18x128xbf16>
    %16 = arith.extf %15 : vector<18x128xbf16> to vector<18x128xf32>
    %17 = vector.extract_strided_slice %16 {offsets = [0, 0], sizes = [16, 128], strides = [1, 1]} : vector<18x128xf32> to vector<16x128xf32>
    %18 = vector.extract_strided_slice %16 {offsets = [1, 0], sizes = [16, 128], strides = [1, 1]} : vector<18x128xf32> to vector<16x128xf32>
    %19 = vector.extract_strided_slice %16 {offsets = [2, 0], sizes = [16, 128], strides = [1, 1]} : vector<18x128xf32> to vector<16x128xf32>
    %c0_9 = arith.constant 0 : index
    %c0_10 = arith.constant 0 : index
    %c0_11 = arith.constant 0 : index
    %c0_12 = arith.constant 0 : index
    %20 = vector.load %arg4[%c0_9, %c0_10, %c0_11, %c0_12] : memref<1x1x18x128xbf16, #tpu.memory_space<vmem>>, vector<1x1x18x128xbf16>
    %21 = vector.shape_cast %20 : vector<1x1x18x128xbf16> to vector<18x128xbf16>
    %22 = arith.extf %21 : vector<18x128xbf16> to vector<18x128xf32>
    %23 = vector.extract_strided_slice %22 {offsets = [0, 0], sizes = [16, 128], strides = [1, 1]} : vector<18x128xf32> to vector<16x128xf32>
    %24 = vector.extract_strided_slice %22 {offsets = [1, 0], sizes = [16, 128], strides = [1, 1]} : vector<18x128xf32> to vector<16x128xf32>
    %25 = vector.extract_strided_slice %22 {offsets = [2, 0], sizes = [16, 128], strides = [1, 1]} : vector<18x128xf32> to vector<16x128xf32>
    %26 = tpu.concatenate %11, %12, %13, %17, %18, %19, %23, %24, %25 in 1 : vector<16x128xf32>, vector<16x128xf32>, vector<16x128xf32>, vector<16x128xf32>, vector<16x128xf32>, vector<16x128xf32>, vector<16x128xf32>, vector<16x128xf32>, vector<16x128xf32> -> vector<16x1152xf32>
    %27 = arith.truncf %26 : vector<16x1152xf32> to vector<16x1152xbf16>
    %c0_13 = arith.constant 0 : index
    %c0_14 = arith.constant 0 : index
    %28 = vector.load %arg5[%c0_13, %c0_14] : memref<1152x128xbf16, #tpu.memory_space<vmem>>, vector<1152x128xbf16>
    %cst = arith.constant dense<0.000000e+00> : vector<16x128xf32>
    %29 = tpu.matmul %27, %28, %cst {dimension_numbers = #tpu.dot_dimension_numbers<[1], [0], [0], [1], [0, 0, 1, 1], [], []>} : vector<16x1152xbf16>, vector<1152x128xbf16>, vector<16x128xf32> -> vector<16x128xf32>
    %c0_15 = arith.constant 0 : index
    %c0_16 = arith.constant 0 : index
    %c0_17 = arith.constant 0 : index
    %c0_18 = arith.constant 0 : index
    %30 = vector.load %arg6[%c0_15, %c0_16, %c0_17, %c0_18] : memref<1x1x16x128xf32, #tpu.memory_space<vmem>>, vector<1x1x16x128xf32>
    %31 = vector.shape_cast %30 : vector<1x1x16x128xf32> to vector<16x128xf32>
    %32 = vector.shape_cast %29 : vector<16x128xf32> to vector<1x1x16x128xf32>
    tpu.vector_store %arg6[%c0_15, %c0_16, %c0_17, %c0_18], %32 {strides = array<i32>} : memref<1x1x16x128xf32, #tpu.memory_space<vmem>>, vector<1x1x16x128xf32>,
    %c0_19 = arith.constant 0 : index
    %c0_20 = arith.constant 0 : index
    %33 = vector.load %arg9[%c0_19, %c0_20] : memref<1x128xf32, #tpu.memory_space<vmem>>, vector<1x128xf32>
    %cst_21 = arith.constant dense<0.000000e+00> : vector<128xf32>
    %34 = vector.multi_reduction <add>, %29, %cst_21 [0] : vector<16x128xf32> to vector<128xf32>
    %35 = vector.shape_cast %34 : vector<128xf32> to vector<1x128xf32>
    %36 = arith.addf %33, %35 : vector<1x128xf32>
    %c0_22 = arith.constant 0 : index
    %c0_23 = arith.constant 0 : index
    %37 = vector.load %arg9[%c0_22, %c0_23] : memref<1x128xf32, #tpu.memory_space<vmem>>, vector<1x128xf32>
    tpu.vector_store %arg9[%c0_22, %c0_23], %36 {strides = array<i32>} : memref<1x128xf32, #tpu.memory_space<vmem>>, vector<1x128xf32>,
    %c0_24 = arith.constant 0 : index
    %c0_25 = arith.constant 0 : index
    %38 = vector.load %arg10[%c0_24, %c0_25] : memref<1x128xf32, #tpu.memory_space<vmem>>, vector<1x128xf32>
    %39 = arith.mulf %29, %29 : vector<16x128xf32>
    %cst_26 = arith.constant dense<0.000000e+00> : vector<128xf32>
    %40 = vector.multi_reduction <add>, %39, %cst_26 [0] : vector<16x128xf32> to vector<128xf32>
    %41 = vector.shape_cast %40 : vector<128xf32> to vector<1x128xf32>
    %42 = arith.addf %38, %41 : vector<1x128xf32>
    %c0_27 = arith.constant 0 : index
    %c0_28 = arith.constant 0 : index
    %43 = vector.load %arg10[%c0_27, %c0_28] : memref<1x128xf32, #tpu.memory_space<vmem>>, vector<1x128xf32>
    tpu.vector_store %arg10[%c0_27, %c0_28], %42 {strides = array<i32>} : memref<1x128xf32, #tpu.memory_space<vmem>>, vector<1x128xf32>,
    %44 = arith.extui %5 : i1 to i32
    %c0_i32_29 = arith.constant 0 : i32
    %45 = arith.cmpi ne, %44, %c0_i32_29 : i32
    scf.if %45 {
      %c0_30 = arith.constant 0 : index
      %c0_31 = arith.constant 0 : index
      %46 = vector.load %arg9[%c0_30, %c0_31] : memref<1x128xf32, #tpu.memory_space<vmem>>, vector<1x128xf32>
      %c0_32 = arith.constant 0 : index
      %c0_33 = arith.constant 0 : index
      %47 = vector.load %arg7[%c0_32, %c0_33] : memref<1x128xf32, #tpu.memory_space<vmem>>, vector<1x128xf32>
      tpu.vector_store %arg7[%c0_32, %c0_33], %46 {strides = array<i32>} : memref<1x128xf32, #tpu.memory_space<vmem>>, vector<1x128xf32>,
      %c0_34 = arith.constant 0 : index
      %c0_35 = arith.constant 0 : index
      %48 = vector.load %arg10[%c0_34, %c0_35] : memref<1x128xf32, #tpu.memory_space<vmem>>, vector<1x128xf32>
      %c0_36 = arith.constant 0 : index
      %c0_37 = arith.constant 0 : index
      %49 = vector.load %arg8[%c0_36, %c0_37] : memref<1x128xf32, #tpu.memory_space<vmem>>, vector<1x128xf32>
      tpu.vector_store %arg8[%c0_36, %c0_37], %48 {strides = array<i32>} : memref<1x128xf32, #tpu.memory_space<vmem>>, vector<1x128xf32>,
    } else {
    }
    return
  }
  func.func @transform_0(%arg0: i32, %arg1: i32) -> (i32, i32, i32, i32) {
    %c0_i32 = arith.constant 0 : i32
    %0 = arith.addi %arg1, %c0_i32 : i32
    %c0_i32_0 = arith.constant 0 : i32
    %c0_i32_1 = arith.constant 0 : i32
    %c0_i32_2 = arith.constant 0 : i32
    return %arg0, %0, %c0_i32_0, %c0_i32_1 : i32, i32, i32, i32
  }
  func.func @transform_1(%arg0: i32, %arg1: i32) -> (i32, i32, i32, i32) {
    %c1_i32 = arith.constant 1 : i32
    %0 = arith.addi %arg1, %c1_i32 : i32
    %c0_i32 = arith.constant 0 : i32
    %c0_i32_0 = arith.constant 0 : i32
    %c0_i32_1 = arith.constant 0 : i32
    return %arg0, %0, %c0_i32, %c0_i32_0 : i32, i32, i32, i32
  }
  func.func @transform_2(%arg0: i32, %arg1: i32) -> (i32, i32, i32, i32) {
    %c2_i32 = arith.constant 2 : i32
    %0 = arith.addi %arg1, %c2_i32 : i32
    %c0_i32 = arith.constant 0 : i32
    %c0_i32_0 = arith.constant 0 : i32
    %c0_i32_1 = arith.constant 0 : i32
    return %arg0, %0, %c0_i32, %c0_i32_0 : i32, i32, i32, i32
  }
  func.func @transform_3(%arg0: i32, %arg1: i32) -> (i32, i32) {
    %c0_i32 = arith.constant 0 : i32
    %c0_i32_0 = arith.constant 0 : i32
    %c0_i32_1 = arith.constant 0 : i32
    return %c0_i32, %c0_i32_0 : i32, i32
  }
  func.func @transform_4(%arg0: i32, %arg1: i32) -> (i32, i32, i32, i32) {
    %c0_i32 = arith.constant 0 : i32
    %c0_i32_0 = arith.constant 0 : i32
    %c0_i32_1 = arith.constant 0 : i32
    return %arg0, %arg1, %c0_i32, %c0_i32_0 : i32, i32, i32, i32
  }
  func.func @transform_5(%arg0: i32, %arg1: i32) -> (i32, i32) {
    %c0_i32 = arith.constant 0 : i32
    %c0_i32_0 = arith.constant 0 : i32
    %c0_i32_1 = arith.constant 0 : i32
    return %c0_i32, %c0_i32_0 : i32, i32
  }
  func.func @transform_6(%arg0: i32, %arg1: i32) -> (i32, i32) {
    %c0_i32 = arith.constant 0 : i32
    %c0_i32_0 = arith.constant 0 : i32
    %c0_i32_1 = arith.constant 0 : i32
    return %c0_i32, %c0_i32_0 : i32, i32
  }
}

module attributes {stable_mosaic.version = 11 : i64} {
  func.func @_bn_lrelu_kernel(%arg0: i32, %arg1: memref<512x128xf32, #tpu.memory_space<vmem>>, %arg2: memref<1x128xf32, #tpu.memory_space<vmem>>, %arg3: memref<1x128xf32, #tpu.memory_space<vmem>>, %arg4: memref<512x128xbf16, #tpu.memory_space<vmem>>) attributes {dimension_semantics = [#tpu.dimension_semantics<parallel>], iteration_bounds = array<i64: 1>, scalar_prefetch = 0 : i64, scratch_operands = 0 : i64, tpu.core_type = #tpu.core_type<tc>, window_params = [{transform_indices = @transform_0, window_bounds = array<i64: 512, 128>}, {pipeline_mode = #tpu.pipeline_mode<synchronous>, transform_indices = @transform_1, window_bounds = array<i64: 1, 128>}, {pipeline_mode = #tpu.pipeline_mode<synchronous>, transform_indices = @transform_2, window_bounds = array<i64: 1, 128>}, {transform_indices = @transform_3, window_bounds = array<i64: 512, 128>}]} {
    %c0 = arith.constant 0 : index
    %c0_0 = arith.constant 0 : index
    %0 = vector.load %arg1[%c0, %c0_0] : memref<512x128xf32, #tpu.memory_space<vmem>>, vector<512x128xf32>
    %c0_1 = arith.constant 0 : index
    %c0_2 = arith.constant 0 : index
    %1 = vector.load %arg2[%c0_1, %c0_2] : memref<1x128xf32, #tpu.memory_space<vmem>>, vector<1x128xf32>
    %2 = vector.broadcast %1 : vector<1x128xf32> to vector<512x128xf32>
    %3 = arith.mulf %0, %2 : vector<512x128xf32>
    %c0_3 = arith.constant 0 : index
    %c0_4 = arith.constant 0 : index
    %4 = vector.load %arg3[%c0_3, %c0_4] : memref<1x128xf32, #tpu.memory_space<vmem>>, vector<1x128xf32>
    %5 = vector.broadcast %4 : vector<1x128xf32> to vector<512x128xf32>
    %6 = arith.addf %3, %5 : vector<512x128xf32>
    %cst = arith.constant 0.000000e+00 : f32
    %7 = vector.broadcast %cst : f32 to vector<512x128xf32>
    %8 = arith.cmpf oge, %6, %7 : vector<512x128xf32>
    %cst_5 = arith.constant 0.00999999977 : f32
    %9 = vector.broadcast %cst_5 : f32 to vector<512x128xf32>
    %10 = arith.mulf %9, %6 : vector<512x128xf32>
    %11 = arith.select %8, %6, %10 : vector<512x128xi1>, vector<512x128xf32>
    %12 = arith.truncf %11 : vector<512x128xf32> to vector<512x128xbf16>
    %c0_6 = arith.constant 0 : index
    %c0_7 = arith.constant 0 : index
    %13 = vector.load %arg4[%c0_6, %c0_7] : memref<512x128xbf16, #tpu.memory_space<vmem>>, vector<512x128xbf16>
    tpu.vector_store %arg4[%c0_6, %c0_7], %12 {strides = array<i32>} : memref<512x128xbf16, #tpu.memory_space<vmem>>, vector<512x128xbf16>,
    return
  }
  func.func @transform_0(%arg0: i32) -> (i32, i32) {
    %c0_i32 = arith.constant 0 : i32
    %c0_i32_0 = arith.constant 0 : i32
    return %arg0, %c0_i32 : i32, i32
  }
  func.func @transform_1(%arg0: i32) -> (i32, i32) {
    %c0_i32 = arith.constant 0 : i32
    %c0_i32_0 = arith.constant 0 : i32
    %c0_i32_1 = arith.constant 0 : i32
    return %c0_i32, %c0_i32_0 : i32, i32
  }
  func.func @transform_2(%arg0: i32) -> (i32, i32) {
    %c0_i32 = arith.constant 0 : i32
    %c0_i32_0 = arith.constant 0 : i32
    %c0_i32_1 = arith.constant 0 : i32
    return %c0_i32, %c0_i32_0 : i32, i32
  }
  func.func @transform_3(%arg0: i32) -> (i32, i32) {
    %c0_i32 = arith.constant 0 : i32
    %c0_i32_0 = arith.constant 0 : i32
    return %arg0, %c0_i32 : i32, i32
  }
}

module attributes {stable_mosaic.version = 11 : i64} {
  func.func @_bn_lrelu_kernel(%arg0: i32, %arg1: memref<512x128xf32, #tpu.memory_space<vmem>>, %arg2: memref<1x128xf32, #tpu.memory_space<vmem>>, %arg3: memref<1x128xf32, #tpu.memory_space<vmem>>, %arg4: memref<512x128xf32, #tpu.memory_space<vmem>>) attributes {dimension_semantics = [#tpu.dimension_semantics<parallel>], iteration_bounds = array<i64: 1>, scalar_prefetch = 0 : i64, scratch_operands = 0 : i64, tpu.core_type = #tpu.core_type<tc>, window_params = [{transform_indices = @transform_0, window_bounds = array<i64: 512, 128>}, {pipeline_mode = #tpu.pipeline_mode<synchronous>, transform_indices = @transform_1, window_bounds = array<i64: 1, 128>}, {pipeline_mode = #tpu.pipeline_mode<synchronous>, transform_indices = @transform_2, window_bounds = array<i64: 1, 128>}, {transform_indices = @transform_3, window_bounds = array<i64: 512, 128>}]} {
    %c0 = arith.constant 0 : index
    %c0_0 = arith.constant 0 : index
    %0 = vector.load %arg1[%c0, %c0_0] : memref<512x128xf32, #tpu.memory_space<vmem>>, vector<512x128xf32>
    %c0_1 = arith.constant 0 : index
    %c0_2 = arith.constant 0 : index
    %1 = vector.load %arg2[%c0_1, %c0_2] : memref<1x128xf32, #tpu.memory_space<vmem>>, vector<1x128xf32>
    %2 = vector.broadcast %1 : vector<1x128xf32> to vector<512x128xf32>
    %3 = arith.mulf %0, %2 : vector<512x128xf32>
    %c0_3 = arith.constant 0 : index
    %c0_4 = arith.constant 0 : index
    %4 = vector.load %arg3[%c0_3, %c0_4] : memref<1x128xf32, #tpu.memory_space<vmem>>, vector<1x128xf32>
    %5 = vector.broadcast %4 : vector<1x128xf32> to vector<512x128xf32>
    %6 = arith.addf %3, %5 : vector<512x128xf32>
    %cst = arith.constant 0.000000e+00 : f32
    %7 = vector.broadcast %cst : f32 to vector<512x128xf32>
    %8 = arith.cmpf oge, %6, %7 : vector<512x128xf32>
    %cst_5 = arith.constant 0.00999999977 : f32
    %9 = vector.broadcast %cst_5 : f32 to vector<512x128xf32>
    %10 = arith.mulf %9, %6 : vector<512x128xf32>
    %11 = arith.select %8, %6, %10 : vector<512x128xi1>, vector<512x128xf32>
    %c0_6 = arith.constant 0 : index
    %c0_7 = arith.constant 0 : index
    %12 = vector.load %arg4[%c0_6, %c0_7] : memref<512x128xf32, #tpu.memory_space<vmem>>, vector<512x128xf32>
    tpu.vector_store %arg4[%c0_6, %c0_7], %11 {strides = array<i32>} : memref<512x128xf32, #tpu.memory_space<vmem>>, vector<512x128xf32>,
    return
  }
  func.func @transform_0(%arg0: i32) -> (i32, i32) {
    %c0_i32 = arith.constant 0 : i32
    %c0_i32_0 = arith.constant 0 : i32
    return %arg0, %c0_i32 : i32, i32
  }
  func.func @transform_1(%arg0: i32) -> (i32, i32) {
    %c0_i32 = arith.constant 0 : i32
    %c0_i32_0 = arith.constant 0 : i32
    %c0_i32_1 = arith.constant 0 : i32
    return %c0_i32, %c0_i32_0 : i32, i32
  }
  func.func @transform_2(%arg0: i32) -> (i32, i32) {
    %c0_i32 = arith.constant 0 : i32
    %c0_i32_0 = arith.constant 0 : i32
    %c0_i32_1 = arith.constant 0 : i32
    return %c0_i32, %c0_i32_0 : i32, i32
  }
  func.func @transform_3(%arg0: i32) -> (i32, i32) {
    %c0_i32 = arith.constant 0 : i32
    %c0_i32_0 = arith.constant 0 : i32
    return %arg0, %c0_i32 : i32, i32
  }
}

</mosaic_0001>

<llo_original>
// kernel: double_conv.5
$region0: #{double_conv.5}
  #allocation0 [shape = 'u32[]', space=smem, size = 0x4, offset = 0x4, fixed_abs, tag = 'smem constant byte address 0x4 - core index']
  #allocation1 [shape = 'u32[144,128]{1,0:T(1,128)}', space=vmem, size = 0x12000, scoped, tag = 'internal scratch']
  %s0 = inlined_call_operand.vmem [shape: f32[512,128], index: 0, kind: input, shape index: {}]
  %s1 = inlined_call_operand.vmem [shape: f32[1,128], index: 1, kind: input, shape index: {}]
  %s2 = inlined_call_operand.vmem [shape: f32[1,128], index: 2, kind: input, shape index: {}]
  %s3 = inlined_call_operand.vmem [shape: bf16[512,128], index: 3, kind: output, shape index: {}]
  %s4 = sld [smem:[#allocation0]]
  $region22: #{double_conv.5} parent=0
    _
  %s6 = ssub.s32 1, %s4
  %s7 = scalar_select 0, %s6, %s4
  // Predicated region
  $region2: #{double_conv.5} parent=0 // pred_check
    _
  $region3: #{double_conv.5} parent=0 // pred_check_branch
    %9 = sbr.rel (0) target = $region5
  $region4: #{double_conv.5} parent=0 // pred_region
    _
  $region5: #{double_conv.5} parent=0 // pred_fallthru
    _
  // Predicated region
  $region6: #{double_conv.5} parent=0 // pred_check
    _
  $region7: #{double_conv.5} parent=0 // pred_check_branch
    %11 = sbr.rel (0) target = $region9
  $region8: #{double_conv.5} parent=0 // pred_region
    _
  $region9: #{double_conv.5} parent=0 // pred_fallthru
    _
  // Predicated region
  $region10: #{double_conv.5} parent=0 // pred_check
    _
  $region11: #{double_conv.5} parent=0 // pred_check_branch
    %13 = sbr.rel (0) target = $region13
  $region12: #{double_conv.5} parent=0 // pred_region
    _
  $region13: #{double_conv.5} parent=0 // pred_fallthru
    _
  %v14 = vld [vmem:[%s0] sm:$0xff]
  %v15 = vld [vmem:[%s0 + $0x8] sm:$0xff]
  %v16 = vld [vmem:[%s0 + $0x10] sm:$0xff]
  %v17 = vld [vmem:[%s0 + $0x18] sm:$0xff]
  %v18 = vld [vmem:[%s0 + $0x20] sm:$0xff]
  %v19 = vld [vmem:[%s0 + $0x28] sm:$0xff]
  %v20 = vld [vmem:[%s0 + $0x30] sm:$0xff]
  %v21 = vld [vmem:[%s0 + $0x38] sm:$0xff]
  %v22 = vld [vmem:[%s0 + $0x40] sm:$0xff]
  %v23 = vld [vmem:[%s0 + $0x48] sm:$0xff]
  %v24 = vld [vmem:[%s0 + $0x50] sm:$0xff]
  %v25 = vld [vmem:[%s0 + $0x58] sm:$0xff]
  %v26 = vld [vmem:[%s0 + $0x60] sm:$0xff]
  %v27 = vld [vmem:[%s0 + $0x68] sm:$0xff]
  %v28 = vld [vmem:[%s0 + $0x70] sm:$0xff]
  %v29 = vld [vmem:[%s0 + $0x78] sm:$0xff]
  %v30 = vld [vmem:[%s0 + $0x80] sm:$0xff]
  %v31 = vld [vmem:[%s0 + $0x88] sm:$0xff]
  %v32 = vld [vmem:[%s0 + $0x90] sm:$0xff]
  %v33 = vld [vmem:[%s0 + $0x98] sm:$0xff]
  %v34 = vld [vmem:[%s0 + $0xa0] sm:$0xff]
  %v35 = vld [vmem:[%s0 + $0xa8] sm:$0xff]
  %v36 = vld [vmem:[%s0 + $0xb0] sm:$0xff]
  %v37 = vld [vmem:[%s0 + $0xb8] sm:$0xff]
  %v38 = vld [vmem:[%s0 + $0xc0] sm:$0xff]
  %v39 = vld [vmem:[%s0 + $0xc8] sm:$0xff]
  %v40 = vld [vmem:[%s0 + $0xd0] sm:$0xff]
  %v41 = vld [vmem:[%s0 + $0xd8] sm:$0xff]
  %v42 = vld [vmem:[%s0 + $0xe0] sm:$0xff]
  %v43 = vld [vmem:[%s0 + $0xe8] sm:$0xff]
  %v44 = vld [vmem:[%s0 + $0xf0] sm:$0xff]
  %v45 = vld [vmem:[%s0 + $0xf8] sm:$0xff]
  %v46 = vld [vmem:[%s0 + $0x100] sm:$0xff]
  %v47 = vld [vmem:[%s0 + $0x108] sm:$0xff]
  %v48 = vld [vmem:[%s0 + $0x110] sm:$0xff]
  %v49 = vld [vmem:[%s0 + $0x118] sm:$0xff]
  %v50 = vld [vmem:[%s0 + $0x120] sm:$0xff]
  %v51 = vld [vmem:[%s0 + $0x128] sm:$0xff]
  %v52 = vld [vmem:[%s0 + $0x130] sm:$0xff]
  %v53 = vld [vmem:[%s0 + $0x138] sm:$0xff]
  %v54 = vld [vmem:[%s0 + $0x140] sm:$0xff]
  %v55 = vld [vmem:[%s0 + $0x148] sm:$0xff]
  %v56 = vld [vmem:[%s0 + $0x150] sm:$0xff]
  %v57 = vld [vmem:[%s0 + $0x158] sm:$0xff]
  %v58 = vld [vmem:[%s0 + $0x160] sm:$0xff]
  %v59 = vld [vmem:[%s0 + $0x168] sm:$0xff]
  %v60 = vld [vmem:[%s0 + $0x170] sm:$0xff]
  %v61 = vld [vmem:[%s0 + $0x178] sm:$0xff]
  %v62 = vld [vmem:[%s0 + $0x180] sm:$0xff]
  %v63 = vld [vmem:[%s0 + $0x188] sm:$0xff]
  %v64 = vld [vmem:[%s0 + $0x190] sm:$0xff]
  %v65 = vld [vmem:[%s0 + $0x198] sm:$0xff]
  %v66 = vld [vmem:[%s0 + $0x1a0] sm:$0xff]
  %v67 = vld [vmem:[%s0 + $0x1a8] sm:$0xff]
  %v68 = vld [vmem:[%s0 + $0x1b0] sm:$0xff]
  %v69 = vld [vmem:[%s0 + $0x1b8] sm:$0xff]
  %v70 = vld [vmem:[%s0 + $0x1c0] sm:$0xff]
  %v71 = vld [vmem:[%s0 + $0x1c8] sm:$0xff]
  %v72 = vld [vmem:[%s0 + $0x1d0] sm:$0xff]
  %v73 = vld [vmem:[%s0 + $0x1d8] sm:$0xff]
  %v74 = vld [vmem:[%s0 + $0x1e0] sm:$0xff]
  %v75 = vld [vmem:[%s0 + $0x1e8] sm:$0xff]
  %v76 = vld [vmem:[%s0 + $0x1f0] sm:$0xff]
  %v77 = vld [vmem:[%s0 + $0x1f8] sm:$0xff]
  %v78 = vld [vmem:[%s1] sm:$0x1]
  %v80 = vlaneseq
  %v81 = vshrl.u32 %v80, 7
  %v82 = vsub.s32 0, %v81
  %v83 = vrot.slane %v78, %v82
  %v85 = vmul.f32 %v14, %v83
  %v86 = vmul.f32 %v15, %v83
  %v87 = vmul.f32 %v16, %v83
  %v88 = vmul.f32 %v17, %v83
  %v89 = vmul.f32 %v18, %v83
  %v90 = vmul.f32 %v19, %v83
  %v91 = vmul.f32 %v20, %v83
  %v92 = vmul.f32 %v21, %v83
  %v93 = vmul.f32 %v22, %v83
  %v94 = vmul.f32 %v23, %v83
  %v95 = vmul.f32 %v24, %v83
  %v96 = vmul.f32 %v25, %v83
  %v97 = vmul.f32 %v26, %v83
  %v98 = vmul.f32 %v27, %v83
  %v99 = vmul.f32 %v28, %v83
  %v100 = vmul.f32 %v29, %v83
  %v101 = vmul.f32 %v30, %v83
  %v102 = vmul.f32 %v31, %v83
  %v103 = vmul.f32 %v32, %v83
  %v104 = vmul.f32 %v33, %v83
  %v105 = vmul.f32 %v34, %v83
  %v106 = vmul.f32 %v35, %v83
  %v107 = vmul.f32 %v36, %v83
  %v108 = vmul.f32 %v37, %v83
  %v109 = vmul.f32 %v38, %v83
  %v110 = vmul.f32 %v39, %v83
  %v111 = vmul.f32 %v40, %v83
  %v112 = vmul.f32 %v41, %v83
  %v113 = vmul.f32 %v42, %v83
  %v114 = vmul.f32 %v43, %v83
  %v115 = vmul.f32 %v44, %v83
  %v116 = vmul.f32 %v45, %v83
  %v117 = vmul.f32 %v46, %v83
  %v118 = vmul.f32 %v47, %v83
  %v119 = vmul.f32 %v48, %v83
  %v120 = vmul.f32 %v49, %v83
  %v121 = vmul.f32 %v50, %v83
  %v122 = vmul.f32 %v51, %v83
  %v123 = vmul.f32 %v52, %v83
  %v124 = vmul.f32 %v53, %v83
  %v125 = vmul.f32 %v54, %v83
  %v126 = vmul.f32 %v55, %v83
  %v127 = vmul.f32 %v56, %v83
  %v128 = vmul.f32 %v57, %v83
  %v129 = vmul.f32 %v58, %v83
  %v130 = vmul.f32 %v59, %v83
  %v131 = vmul.f32 %v60, %v83
  %v132 = vmul.f32 %v61, %v83
  %v133 = vmul.f32 %v62, %v83
  %v134 = vmul.f32 %v63, %v83
  %v135 = vmul.f32 %v64, %v83
  %v136 = vmul.f32 %v65, %v83
  %v137 = vmul.f32 %v66, %v83
  %v138 = vmul.f32 %v67, %v83
  %v139 = vmul.f32 %v68, %v83
  %v140 = vmul.f32 %v69, %v83
  %v141 = vmul.f32 %v70, %v83
  %v142 = vmul.f32 %v71, %v83
  %v143 = vmul.f32 %v72, %v83
  %v144 = vmul.f32 %v73, %v83
  %v145 = vmul.f32 %v74, %v83
  %v146 = vmul.f32 %v75, %v83
  %v147 = vmul.f32 %v76, %v83
  %v148 = vmul.f32 %v77, %v83
  %v149 = vld [vmem:[%s2] sm:$0x1]
  %v151 = vlaneseq
  %v152 = vshrl.u32 %v151, 7
  %v153 = vsub.s32 0, %v152
  %v154 = vrot.slane %v149, %v153
  %v156 = vadd.f32 %v85, %v154
  %v157 = vadd.f32 %v86, %v154
  %v158 = vadd.f32 %v87, %v154
  %v159 = vadd.f32 %v88, %v154
  %v160 = vadd.f32 %v89, %v154
  %v161 = vadd.f32 %v90, %v154
  %v162 = vadd.f32 %v91, %v154
  %v163 = vadd.f32 %v92, %v154
  %v164 = vadd.f32 %v93, %v154
  %v165 = vadd.f32 %v94, %v154
  %v166 = vadd.f32 %v95, %v154
  %v167 = vadd.f32 %v96, %v154
  %v168 = vadd.f32 %v97, %v154
  %v169 = vadd.f32 %v98, %v154
  %v170 = vadd.f32 %v99, %v154
  %v171 = vadd.f32 %v100, %v154
  %v172 = vadd.f32 %v101, %v154
  %v173 = vadd.f32 %v102, %v154
  %v174 = vadd.f32 %v103, %v154
  %v175 = vadd.f32 %v104, %v154
  %v176 = vadd.f32 %v105, %v154
  %v177 = vadd.f32 %v106, %v154
  %v178 = vadd.f32 %v107, %v154
  %v179 = vadd.f32 %v108, %v154
  %v180 = vadd.f32 %v109, %v154
  %v181 = vadd.f32 %v110, %v154
  %v182 = vadd.f32 %v111, %v154
  %v183 = vadd.f32 %v112, %v154
  %v184 = vadd.f32 %v113, %v154
  %v185 = vadd.f32 %v114, %v154
  %v186 = vadd.f32 %v115, %v154
  %v187 = vadd.f32 %v116, %v154
  %v188 = vadd.f32 %v117, %v154
  %v189 = vadd.f32 %v118, %v154
  %v190 = vadd.f32 %v119, %v154
  %v191 = vadd.f32 %v120, %v154
  %v192 = vadd.f32 %v121, %v154
  %v193 = vadd.f32 %v122, %v154
  %v194 = vadd.f32 %v123, %v154
  %v195 = vadd.f32 %v124, %v154
  %v196 = vadd.f32 %v125, %v154
  %v197 = vadd.f32 %v126, %v154
  %v198 = vadd.f32 %v127, %v154
  %v199 = vadd.f32 %v128, %v154
  %v200 = vadd.f32 %v129, %v154
  %v201 = vadd.f32 %v130, %v154
  %v202 = vadd.f32 %v131, %v154
  %v203 = vadd.f32 %v132, %v154
  %v204 = vadd.f32 %v133, %v154
  %v205 = vadd.f32 %v134, %v154
  %v206 = vadd.f32 %v135, %v154
  %v207 = vadd.f32 %v136, %v154
  %v208 = vadd.f32 %v137, %v154
  %v209 = vadd.f32 %v138, %v154
  %v210 = vadd.f32 %v139, %v154
  %v211 = vadd.f32 %v140, %v154
  %v212 = vadd.f32 %v141, %v154
  %v213 = vadd.f32 %v142, %v154
  %v214 = vadd.f32 %v143, %v154
  %v215 = vadd.f32 %v144, %v154
  %v216 = vadd.f32 %v145, %v154
  %v217 = vadd.f32 %v146, %v154
  %v218 = vadd.f32 %v147, %v154
  %v219 = vadd.f32 %v148, %v154
  %vm220 = vcmp.ge.f32.partialorder %v156, 0.0
  %vm221 = vcmp.ge.f32.partialorder %v157, 0.0
  %vm222 = vcmp.ge.f32.partialorder %v158, 0.0
  %vm223 = vcmp.ge.f32.partialorder %v159, 0.0
  %vm224 = vcmp.ge.f32.partialorder %v160, 0.0
  %vm225 = vcmp.ge.f32.partialorder %v161, 0.0
  %vm226 = vcmp.ge.f32.partialorder %v162, 0.0
  %vm227 = vcmp.ge.f32.partialorder %v163, 0.0
  %vm228 = vcmp.ge.f32.partialorder %v164, 0.0
  %vm229 = vcmp.ge.f32.partialorder %v165, 0.0
  %vm230 = vcmp.ge.f32.partialorder %v166, 0.0
  %vm231 = vcmp.ge.f32.partialorder %v167, 0.0
  %vm232 = vcmp.ge.f32.partialorder %v168, 0.0
  %vm233 = vcmp.ge.f32.partialorder %v169, 0.0
  %vm234 = vcmp.ge.f32.partialorder %v170, 0.0
  %vm235 = vcmp.ge.f32.partialorder %v171, 0.0
  %vm236 = vcmp.ge.f32.partialorder %v172, 0.0
  %vm237 = vcmp.ge.f32.partialorder %v173, 0.0
  %vm238 = vcmp.ge.f32.partialorder %v174, 0.0
  %vm239 = vcmp.ge.f32.partialorder %v175, 0.0
  %vm240 = vcmp.ge.f32.partialorder %v176, 0.0
  %vm241 = vcmp.ge.f32.partialorder %v177, 0.0
  %vm242 = vcmp.ge.f32.partialorder %v178, 0.0
  %vm243 = vcmp.ge.f32.partialorder %v179, 0.0
  %vm244 = vcmp.ge.f32.partialorder %v180, 0.0
  %vm245 = vcmp.ge.f32.partialorder %v181, 0.0
  %vm246 = vcmp.ge.f32.partialorder %v182, 0.0
  %vm247 = vcmp.ge.f32.partialorder %v183, 0.0
  %vm248 = vcmp.ge.f32.partialorder %v184, 0.0
  %vm249 = vcmp.ge.f32.partialorder %v185, 0.0
  %vm250 = vcmp.ge.f32.partialorder %v186, 0.0
  %vm251 = vcmp.ge.f32.partialorder %v187, 0.0
  %vm252 = vcmp.ge.f32.partialorder %v188, 0.0
  %vm253 = vcmp.ge.f32.partialorder %v189, 0.0
  %vm254 = vcmp.ge.f32.partialorder %v190, 0.0
  %vm255 = vcmp.ge.f32.partialorder %v191, 0.0
  %vm256 = vcmp.ge.f32.partialorder %v192, 0.0
  %vm257 = vcmp.ge.f32.partialorder %v193, 0.0
  %vm258 = vcmp.ge.f32.partialorder %v194, 0.0
  %vm259 = vcmp.ge.f32.partialorder %v195, 0.0
  %vm260 = vcmp.ge.f32.partialorder %v196, 0.0
  %vm261 = vcmp.ge.f32.partialorder %v197, 0.0
  %vm262 = vcmp.ge.f32.partialorder %v198, 0.0
  %vm263 = vcmp.ge.f32.partialorder %v199, 0.0
  %vm264 = vcmp.ge.f32.partialorder %v200, 0.0
  %vm265 = vcmp.ge.f32.partialorder %v201, 0.0
  %vm266 = vcmp.ge.f32.partialorder %v202, 0.0
  %vm267 = vcmp.ge.f32.partialorder %v203, 0.0
  %vm268 = vcmp.ge.f32.partialorder %v204, 0.0
  %vm269 = vcmp.ge.f32.partialorder %v205, 0.0
  %vm270 = vcmp.ge.f32.partialorder %v206, 0.0
  %vm271 = vcmp.ge.f32.partialorder %v207, 0.0
  %vm272 = vcmp.ge.f32.partialorder %v208, 0.0
  %vm273 = vcmp.ge.f32.partialorder %v209, 0.0
  %vm274 = vcmp.ge.f32.partialorder %v210, 0.0
  %vm275 = vcmp.ge.f32.partialorder %v211, 0.0
  %vm276 = vcmp.ge.f32.partialorder %v212, 0.0
  %vm277 = vcmp.ge.f32.partialorder %v213, 0.0
  %vm278 = vcmp.ge.f32.partialorder %v214, 0.0
  %vm279 = vcmp.ge.f32.partialorder %v215, 0.0
  %vm280 = vcmp.ge.f32.partialorder %v216, 0.0
  %vm281 = vcmp.ge.f32.partialorder %v217, 0.0
  %vm282 = vcmp.ge.f32.partialorder %v218, 0.0
  %vm283 = vcmp.ge.f32.partialorder %v219, 0.0
  %v284 = vmul.f32 %v156, 0.01
  %v285 = vmul.f32 %v157, 0.01
  %v286 = vmul.f32 %v158, 0.01
  %v287 = vmul.f32 %v159, 0.01
  %v288 = vmul.f32 %v160, 0.01
  %v289 = vmul.f32 %v161, 0.01
  %v290 = vmul.f32 %v162, 0.01
  %v291 = vmul.f32 %v163, 0.01
  %v292 = vmul.f32 %v164, 0.01
  %v293 = vmul.f32 %v165, 0.01
  %v294 = vmul.f32 %v166, 0.01
  %v295 = vmul.f32 %v167, 0.01
  %v296 = vmul.f32 %v168, 0.01
  %v297 = vmul.f32 %v169, 0.01
  %v298 = vmul.f32 %v170, 0.01
  %v299 = vmul.f32 %v171, 0.01
  %v300 = vmul.f32 %v172, 0.01
  %v301 = vmul.f32 %v173, 0.01
  %v302 = vmul.f32 %v174, 0.01
  %v303 = vmul.f32 %v175, 0.01
  %v304 = vmul.f32 %v176, 0.01
  %v305 = vmul.f32 %v177, 0.01
  %v306 = vmul.f32 %v178, 0.01
  %v307 = vmul.f32 %v179, 0.01
  %v308 = vmul.f32 %v180, 0.01
  %v309 = vmul.f32 %v181, 0.01
  %v310 = vmul.f32 %v182, 0.01
  %v311 = vmul.f32 %v183, 0.01
  %v312 = vmul.f32 %v184, 0.01
  %v313 = vmul.f32 %v185, 0.01
  %v314 = vmul.f32 %v186, 0.01
  %v315 = vmul.f32 %v187, 0.01
  %v316 = vmul.f32 %v188, 0.01
  %v317 = vmul.f32 %v189, 0.01
  %v318 = vmul.f32 %v190, 0.01
  %v319 = vmul.f32 %v191, 0.01
  %v320 = vmul.f32 %v192, 0.01
  %v321 = vmul.f32 %v193, 0.01
  %v322 = vmul.f32 %v194, 0.01
  %v323 = vmul.f32 %v195, 0.01
  %v324 = vmul.f32 %v196, 0.01
  %v325 = vmul.f32 %v197, 0.01
  %v326 = vmul.f32 %v198, 0.01
  %v327 = vmul.f32 %v199, 0.01
  %v328 = vmul.f32 %v200, 0.01
  %v329 = vmul.f32 %v201, 0.01
  %v330 = vmul.f32 %v202, 0.01
  %v331 = vmul.f32 %v203, 0.01
  %v332 = vmul.f32 %v204, 0.01
  %v333 = vmul.f32 %v205, 0.01
  %v334 = vmul.f32 %v206, 0.01
  %v335 = vmul.f32 %v207, 0.01
  %v336 = vmul.f32 %v208, 0.01
  %v337 = vmul.f32 %v209, 0.01
  %v338 = vmul.f32 %v210, 0.01
  %v339 = vmul.f32 %v211, 0.01
  %v340 = vmul.f32 %v212, 0.01
  %v341 = vmul.f32 %v213, 0.01
  %v342 = vmul.f32 %v214, 0.01
  %v343 = vmul.f32 %v215, 0.01
  %v344 = vmul.f32 %v216, 0.01
  %v345 = vmul.f32 %v217, 0.01
  %v346 = vmul.f32 %v218, 0.01
  %v347 = vmul.f32 %v219, 0.01
  %v348 = vsel %vm220, %v156, %v284
  %v349 = vsel %vm221, %v157, %v285
  %v350 = vsel %vm222, %v158, %v286
  %v351 = vsel %vm223, %v159, %v287
  %v352 = vsel %vm224, %v160, %v288
  %v353 = vsel %vm225, %v161, %v289
  %v354 = vsel %vm226, %v162, %v290
  %v355 = vsel %vm227, %v163, %v291
  %v356 = vsel %vm228, %v164, %v292
  %v357 = vsel %vm229, %v165, %v293
  %v358 = vsel %vm230, %v166, %v294
  %v359 = vsel %vm231, %v167, %v295
  %v360 = vsel %vm232, %v168, %v296
  %v361 = vsel %vm233, %v169, %v297
  %v362 = vsel %vm234, %v170, %v298
  %v363 = vsel %vm235, %v171, %v299
  %v364 = vsel %vm236, %v172, %v300
  %v365 = vsel %vm237, %v173, %v301
  %v366 = vsel %vm238, %v174, %v302
  %v367 = vsel %vm239, %v175, %v303
  %v368 = vsel %vm240, %v176, %v304
  %v369 = vsel %vm241, %v177, %v305
  %v370 = vsel %vm242, %v178, %v306
  %v371 = vsel %vm243, %v179, %v307
  %v372 = vsel %vm244, %v180, %v308
  %v373 = vsel %vm245, %v181, %v309
  %v374 = vsel %vm246, %v182, %v310
  %v375 = vsel %vm247, %v183, %v311
  %v376 = vsel %vm248, %v184, %v312
  %v377 = vsel %vm249, %v185, %v313
  %v378 = vsel %vm250, %v186, %v314
  %v379 = vsel %vm251, %v187, %v315
  %v380 = vsel %vm252, %v188, %v316
  %v381 = vsel %vm253, %v189, %v317
  %v382 = vsel %vm254, %v190, %v318
  %v383 = vsel %vm255, %v191, %v319
  %v384 = vsel %vm256, %v192, %v320
  %v385 = vsel %vm257, %v193, %v321
  %v386 = vsel %vm258, %v194, %v322
  %v387 = vsel %vm259, %v195, %v323
  %v388 = vsel %vm260, %v196, %v324
  %v389 = vsel %vm261, %v197, %v325
  %v390 = vsel %vm262, %v198, %v326
  %v391 = vsel %vm263, %v199, %v327
  %v392 = vsel %vm264, %v200, %v328
  %v393 = vsel %vm265, %v201, %v329
  %v394 = vsel %vm266, %v202, %v330
  %v395 = vsel %vm267, %v203, %v331
  %v396 = vsel %vm268, %v204, %v332
  %v397 = vsel %vm269, %v205, %v333
  %v398 = vsel %vm270, %v206, %v334
  %v399 = vsel %vm271, %v207, %v335
  %v400 = vsel %vm272, %v208, %v336
  %v401 = vsel %vm273, %v209, %v337
  %v402 = vsel %vm274, %v210, %v338
  %v403 = vsel %vm275, %v211, %v339
  %v404 = vsel %vm276, %v212, %v340
  %v405 = vsel %vm277, %v213, %v341
  %v406 = vsel %vm278, %v214, %v342
  %v407 = vsel %vm279, %v215, %v343
  %v408 = vsel %vm280, %v216, %v344
  %v409 = vsel %vm281, %v217, %v345
  %v410 = vsel %vm282, %v218, %v346
  %v411 = vsel %vm283, %v219, %v347
  %v412 = vpack.c.bf16 %v349, %v348
  %v413 = vpack.c.bf16 %v351, %v350
  %v414 = vpack.c.bf16 %v353, %v352
  %v415 = vpack.c.bf16 %v355, %v354
  %v416 = vpack.c.bf16 %v357, %v356
  %v417 = vpack.c.bf16 %v359, %v358
  %v418 = vpack.c.bf16 %v361, %v360
  %v419 = vpack.c.bf16 %v363, %v362
  %v420 = vpack.c.bf16 %v365, %v364
  %v421 = vpack.c.bf16 %v367, %v366
  %v422 = vpack.c.bf16 %v369, %v368
  %v423 = vpack.c.bf16 %v371, %v370
  %v424 = vpack.c.bf16 %v373, %v372
  %v425 = vpack.c.bf16 %v375, %v374
  %v426 = vpack.c.bf16 %v377, %v376
  %v427 = vpack.c.bf16 %v379, %v378
  %v428 = vpack.c.bf16 %v381, %v380
  %v429 = vpack.c.bf16 %v383, %v382
  %v430 = vpack.c.bf16 %v385, %v384
  %v431 = vpack.c.bf16 %v387, %v386
  %v432 = vpack.c.bf16 %v389, %v388
  %v433 = vpack.c.bf16 %v391, %v390
  %v434 = vpack.c.bf16 %v393, %v392
  %v435 = vpack.c.bf16 %v395, %v394
  %v436 = vpack.c.bf16 %v397, %v396
  %v437 = vpack.c.bf16 %v399, %v398
  %v438 = vpack.c.bf16 %v401, %v400
  %v439 = vpack.c.bf16 %v403, %v402
  %v440 = vpack.c.bf16 %v405, %v404
  %v441 = vpack.c.bf16 %v407, %v406
  %v442 = vpack.c.bf16 %v409, %v408
  %v443 = vpack.c.bf16 %v411, %v410
  %v476 = vunpack.c.l.b16 %v412
  %v477 = vunpack.c.h.b16 %v412
  %v478 = vunpack.c.l.b16 %v413
  %v479 = vunpack.c.h.b16 %v413
  %v480 = vunpack.c.l.b16 %v414
  %v481 = vunpack.c.h.b16 %v414
  %v482 = vunpack.c.l.b16 %v415
  %v483 = vunpack.c.h.b16 %v415
  %v484 = vunpack.c.l.b16 %v416
  %v485 = vunpack.c.h.b16 %v416
  %v486 = vunpack.c.l.b16 %v417
  %v487 = vunpack.c.h.b16 %v417
  %v488 = vunpack.c.l.b16 %v418
  %v489 = vunpack.c.h.b16 %v418
  %v490 = vunpack.c.l.b16 %v419
  %v491 = vunpack.c.h.b16 %v419
  %v492 = vunpack.c.l.b16 %v420
  %v493 = vunpack.c.h.b16 %v420
  %v494 = vunpack.c.l.b16 %v421
  %v495 = vunpack.c.h.b16 %v421
  %v496 = vunpack.c.l.b16 %v422
  %v497 = vunpack.c.h.b16 %v422
  %v498 = vunpack.c.l.b16 %v423
  %v499 = vunpack.c.h.b16 %v423
  %v500 = vunpack.c.l.b16 %v424
  %v501 = vunpack.c.h.b16 %v424
  %v502 = vunpack.c.l.b16 %v425
  %v503 = vunpack.c.h.b16 %v425
  %v504 = vunpack.c.l.b16 %v426
  %v505 = vunpack.c.h.b16 %v426
  %v506 = vunpack.c.l.b16 %v427
  %v507 = vunpack.c.h.b16 %v427
  %v508 = vunpack.c.l.b16 %v428
  %v509 = vunpack.c.h.b16 %v428
  %v510 = vunpack.c.l.b16 %v429
  %v511 = vunpack.c.h.b16 %v429
  %v512 = vunpack.c.l.b16 %v430
  %v513 = vunpack.c.h.b16 %v430
  %v514 = vunpack.c.l.b16 %v431
  %v515 = vunpack.c.h.b16 %v431
  %v516 = vunpack.c.l.b16 %v432
  %v517 = vunpack.c.h.b16 %v432
  %v518 = vunpack.c.l.b16 %v433
  %v519 = vunpack.c.h.b16 %v433
  %v520 = vunpack.c.l.b16 %v434
  %v521 = vunpack.c.h.b16 %v434
  %v522 = vunpack.c.l.b16 %v435
  %v523 = vunpack.c.h.b16 %v435
  %v524 = vunpack.c.l.b16 %v436
  %v525 = vunpack.c.h.b16 %v436
  %v526 = vunpack.c.l.b16 %v437
  %v527 = vunpack.c.h.b16 %v437
  %v528 = vunpack.c.l.b16 %v438
  %v529 = vunpack.c.h.b16 %v438
  %v530 = vunpack.c.l.b16 %v439
  %v531 = vunpack.c.h.b16 %v439
  %v532 = vunpack.c.l.b16 %v440
  %v533 = vunpack.c.h.b16 %v440
  %v534 = vunpack.c.l.b16 %v441
  %v535 = vunpack.c.h.b16 %v441
  %v536 = vunpack.c.l.b16 %v442
  %v537 = vunpack.c.h.b16 %v442
  %v538 = vunpack.c.l.b16 %v443
  %v539 = vunpack.c.h.b16 %v443
  %v540 = vpack.c.b16 %v476, %v476
  %v541 = vpack.c.b16 %v477, %v477
  %v542 = vpack.c.b16 %v478, %v478
  %v543 = vpack.c.b16 %v479, %v479
  %v544 = vpack.c.b16 %v480, %v480
  %v545 = vpack.c.b16 %v481, %v481
  %v546 = vpack.c.b16 %v482, %v482
  %v547 = vpack.c.b16 %v483, %v483
  %v548 = vpack.c.b16 %v484, %v484
  %v549 = vpack.c.b16 %v485, %v485
  %v550 = vpack.c.b16 %v486, %v486
  %v551 = vpack.c.b16 %v487, %v487
  %v552 = vpack.c.b16 %v488, %v488
  %v553 = vpack.c.b16 %v489, %v489
  %v554 = vpack.c.b16 %v490, %v490
  %v555 = vpack.c.b16 %v491, %v491
  %v556 = vpack.c.b16 %v492, %v492
  %v557 = vpack.c.b16 %v493, %v493
  %v558 = vpack.c.b16 %v494, %v494
  %v559 = vpack.c.b16 %v495, %v495
  %v560 = vpack.c.b16 %v496, %v496
  %v561 = vpack.c.b16 %v497, %v497
  %v562 = vpack.c.b16 %v498, %v498
  %v563 = vpack.c.b16 %v499, %v499
  %v564 = vpack.c.b16 %v500, %v500
  %v565 = vpack.c.b16 %v501, %v501
  %v566 = vpack.c.b16 %v502, %v502
  %v567 = vpack.c.b16 %v503, %v503
  %v568 = vpack.c.b16 %v504, %v504
  %v569 = vpack.c.b16 %v505, %v505
  %v570 = vpack.c.b16 %v506, %v506
  %v571 = vpack.c.b16 %v507, %v507
  %v572 = vpack.c.b16 %v508, %v508
  %v573 = vpack.c.b16 %v509, %v509
  %v574 = vpack.c.b16 %v510, %v510
  %v575 = vpack.c.b16 %v511, %v511
  %v576 = vpack.c.b16 %v512, %v512
  %v577 = vpack.c.b16 %v513, %v513
  %v578 = vpack.c.b16 %v514, %v514
  %v579 = vpack.c.b16 %v515, %v515
  %v580 = vpack.c.b16 %v516, %v516
  %v581 = vpack.c.b16 %v517, %v517
  %v582 = vpack.c.b16 %v518, %v518
  %v583 = vpack.c.b16 %v519, %v519
  %v584 = vpack.c.b16 %v520, %v520
  %v585 = vpack.c.b16 %v521, %v521
  %v586 = vpack.c.b16 %v522, %v522
  %v587 = vpack.c.b16 %v523, %v523
  %v588 = vpack.c.b16 %v524, %v524
  %v589 = vpack.c.b16 %v525, %v525
  %v590 = vpack.c.b16 %v526, %v526
  %v591 = vpack.c.b16 %v527, %v527
  %v592 = vpack.c.b16 %v528, %v528
  %v593 = vpack.c.b16 %v529, %v529
  %v594 = vpack.c.b16 %v530, %v530
  %v595 = vpack.c.b16 %v531, %v531
  %v596 = vpack.c.b16 %v532, %v532
  %v597 = vpack.c.b16 %v533, %v533
  %v598 = vpack.c.b16 %v534, %v534
  %v599 = vpack.c.b16 %v535, %v535
  %v600 = vpack.c.b16 %v536, %v536
  %v601 = vpack.c.b16 %v537, %v537
  %v602 = vpack.c.b16 %v538, %v538
  %v603 = vpack.c.b16 %v539, %v539
  %668 = vst [vmem:[%s3] sm:$0xf] %v540
  %669 = vst [vmem:[%s3 + $0x4] sm:$0xf] %v541
  %670 = vst [vmem:[%s3 + $0x8] sm:$0xf] %v542
  %671 = vst [vmem:[%s3 + $0xc] sm:$0xf] %v543
  %672 = vst [vmem:[%s3 + $0x10] sm:$0xf] %v544
  %673 = vst [vmem:[%s3 + $0x14] sm:$0xf] %v545
  %674 = vst [vmem:[%s3 + $0x18] sm:$0xf] %v546
  %675 = vst [vmem:[%s3 + $0x1c] sm:$0xf] %v547
  %676 = vst [vmem:[%s3 + $0x20] sm:$0xf] %v548
  %677 = vst [vmem:[%s3 + $0x24] sm:$0xf] %v549
  %678 = vst [vmem:[%s3 + $0x28] sm:$0xf] %v550
  %679 = vst [vmem:[%s3 + $0x2c] sm:$0xf] %v551
  %680 = vst [vmem:[%s3 + $0x30] sm:$0xf] %v552
  %681 = vst [vmem:[%s3 + $0x34] sm:$0xf] %v553
  %682 = vst [vmem:[%s3 + $0x38] sm:$0xf] %v554
  %683 = vst [vmem:[%s3 + $0x3c] sm:$0xf] %v555
  %684 = vst [vmem:[%s3 + $0x40] sm:$0xf] %v556
  %685 = vst [vmem:[%s3 + $0x44] sm:$0xf] %v557
  %686 = vst [vmem:[%s3 + $0x48] sm:$0xf] %v558
  %687 = vst [vmem:[%s3 + $0x4c] sm:$0xf] %v559
  %688 = vst [vmem:[%s3 + $0x50] sm:$0xf] %v560
  %689 = vst [vmem:[%s3 + $0x54] sm:$0xf] %v561
  %690 = vst [vmem:[%s3 + $0x58] sm:$0xf] %v562
  %691 = vst [vmem:[%s3 + $0x5c] sm:$0xf] %v563
  %692 = vst [vmem:[%s3 + $0x60] sm:$0xf] %v564
  %693 = vst [vmem:[%s3 + $0x64] sm:$0xf] %v565
  %694 = vst [vmem:[%s3 + $0x68] sm:$0xf] %v566
  %695 = vst [vmem:[%s3 + $0x6c] sm:$0xf] %v567
  %696 = vst [vmem:[%s3 + $0x70] sm:$0xf] %v568
  %697 = vst [vmem:[%s3 + $0x74] sm:$0xf] %v569
  %698 = vst [vmem:[%s3 + $0x78] sm:$0xf] %v570
  %699 = vst [vmem:[%s3 + $0x7c] sm:$0xf] %v571
  %700 = vst [vmem:[%s3 + $0x80] sm:$0xf] %v572
  %701 = vst [vmem:[%s3 + $0x84] sm:$0xf] %v573
  %702 = vst [vmem:[%s3 + $0x88] sm:$0xf] %v574
  %703 = vst [vmem:[%s3 + $0x8c] sm:$0xf] %v575
  %704 = vst [vmem:[%s3 + $0x90] sm:$0xf] %v576
  %705 = vst [vmem:[%s3 + $0x94] sm:$0xf] %v577
  %706 = vst [vmem:[%s3 + $0x98] sm:$0xf] %v578
  %707 = vst [vmem:[%s3 + $0x9c] sm:$0xf] %v579
  %708 = vst [vmem:[%s3 + $0xa0] sm:$0xf] %v580
  %709 = vst [vmem:[%s3 + $0xa4] sm:$0xf] %v581
  %710 = vst [vmem:[%s3 + $0xa8] sm:$0xf] %v582
  %711 = vst [vmem:[%s3 + $0xac] sm:$0xf] %v583
  %712 = vst [vmem:[%s3 + $0xb0] sm:$0xf] %v584
  %713 = vst [vmem:[%s3 + $0xb4] sm:$0xf] %v585
  %714 = vst [vmem:[%s3 + $0xb8] sm:$0xf] %v586
  %715 = vst [vmem:[%s3 + $0xbc] sm:$0xf] %v587
  %716 = vst [vmem:[%s3 + $0xc0] sm:$0xf] %v588
  %717 = vst [vmem:[%s3 + $0xc4] sm:$0xf] %v589
  %718 = vst [vmem:[%s3 + $0xc8] sm:$0xf] %v590
  %719 = vst [vmem:[%s3 + $0xcc] sm:$0xf] %v591
  %720 = vst [vmem:[%s3 + $0xd0] sm:$0xf] %v592
  %721 = vst [vmem:[%s3 + $0xd4] sm:$0xf] %v593
  %722 = vst [vmem:[%s3 + $0xd8] sm:$0xf] %v594
  %723 = vst [vmem:[%s3 + $0xdc] sm:$0xf] %v595
  %724 = vst [vmem:[%s3 + $0xe0] sm:$0xf] %v596
  %725 = vst [vmem:[%s3 + $0xe4] sm:$0xf] %v597
  %726 = vst [vmem:[%s3 + $0xe8] sm:$0xf] %v598
  %727 = vst [vmem:[%s3 + $0xec] sm:$0xf] %v599
  %728 = vst [vmem:[%s3 + $0xf0] sm:$0xf] %v600
  %729 = vst [vmem:[%s3 + $0xf4] sm:$0xf] %v601
  %730 = vst [vmem:[%s3 + $0xf8] sm:$0xf] %v602
  %731 = vst [vmem:[%s3 + $0xfc] sm:$0xf] %v603
  // Predicated region
  $region14: #{double_conv.5} parent=0 // pred_check
    _
  $region15: #{double_conv.5} parent=0 // pred_check_branch
    %733 = sbr.rel (0) target = $region17
  $region16: #{double_conv.5} parent=0 // pred_region
    _
  $region17: #{double_conv.5} parent=0 // pred_fallthru
    _
  // Predicated region
  $region18: #{double_conv.5} parent=0 // pred_check
    _
  $region19: #{double_conv.5} parent=0 // pred_check_branch
    %735 = sbr.rel (0) target = $region21
  $region20: #{double_conv.5} parent=0 // pred_region
    _
  $region21: #{double_conv.5} parent=0 // pred_fallthru
    _

// kernel: double_conv.7
$region0: #{double_conv.7}
  #allocation0 [shape = 'u32[]', space=smem, size = 0x4, offset = 0x4, fixed_abs, tag = 'smem constant byte address 0x4 - core index']
  #allocation1 [shape = 'u32[144,128]{1,0:T(1,128)}', space=vmem, size = 0x12000, scoped, tag = 'internal scratch']
  %s0 = inlined_call_operand.vmem [shape: f32[512,128], index: 0, kind: input, shape index: {}]
  %s1 = inlined_call_operand.vmem [shape: f32[1,128], index: 1, kind: input, shape index: {}]
  %s2 = inlined_call_operand.vmem [shape: f32[1,128], index: 2, kind: input, shape index: {}]
  %s3 = inlined_call_operand.vmem [shape: f32[512,128], index: 3, kind: output, shape index: {}]
  %s4 = sld [smem:[#allocation0]]
  $region22: #{double_conv.7} parent=0
    _
  %s6 = ssub.s32 1, %s4
  %s7 = scalar_select 0, %s6, %s4
  // Predicated region
  $region2: #{double_conv.7} parent=0 // pred_check
    _
  $region3: #{double_conv.7} parent=0 // pred_check_branch
    %9 = sbr.rel (0) target = $region5
  $region4: #{double_conv.7} parent=0 // pred_region
    _
  $region5: #{double_conv.7} parent=0 // pred_fallthru
    _
  // Predicated region
  $region6: #{double_conv.7} parent=0 // pred_check
    _
  $region7: #{double_conv.7} parent=0 // pred_check_branch
    %11 = sbr.rel (0) target = $region9
  $region8: #{double_conv.7} parent=0 // pred_region
    _
  $region9: #{double_conv.7} parent=0 // pred_fallthru
    _
  // Predicated region
  $region10: #{double_conv.7} parent=0 // pred_check
    _
  $region11: #{double_conv.7} parent=0 // pred_check_branch
    %13 = sbr.rel (0) target = $region13
  $region12: #{double_conv.7} parent=0 // pred_region
    _
  $region13: #{double_conv.7} parent=0 // pred_fallthru
    _
  %v14 = vld [vmem:[%s0] sm:$0xff]
  %v15 = vld [vmem:[%s0 + $0x8] sm:$0xff]
  %v16 = vld [vmem:[%s0 + $0x10] sm:$0xff]
  %v17 = vld [vmem:[%s0 + $0x18] sm:$0xff]
  %v18 = vld [vmem:[%s0 + $0x20] sm:$0xff]
  %v19 = vld [vmem:[%s0 + $0x28] sm:$0xff]
  %v20 = vld [vmem:[%s0 + $0x30] sm:$0xff]
  %v21 = vld [vmem:[%s0 + $0x38] sm:$0xff]
  %v22 = vld [vmem:[%s0 + $0x40] sm:$0xff]
  %v23 = vld [vmem:[%s0 + $0x48] sm:$0xff]
  %v24 = vld [vmem:[%s0 + $0x50] sm:$0xff]
  %v25 = vld [vmem:[%s0 + $0x58] sm:$0xff]
  %v26 = vld [vmem:[%s0 + $0x60] sm:$0xff]
  %v27 = vld [vmem:[%s0 + $0x68] sm:$0xff]
  %v28 = vld [vmem:[%s0 + $0x70] sm:$0xff]
  %v29 = vld [vmem:[%s0 + $0x78] sm:$0xff]
  %v30 = vld [vmem:[%s0 + $0x80] sm:$0xff]
  %v31 = vld [vmem:[%s0 + $0x88] sm:$0xff]
  %v32 = vld [vmem:[%s0 + $0x90] sm:$0xff]
  %v33 = vld [vmem:[%s0 + $0x98] sm:$0xff]
  %v34 = vld [vmem:[%s0 + $0xa0] sm:$0xff]
  %v35 = vld [vmem:[%s0 + $0xa8] sm:$0xff]
  %v36 = vld [vmem:[%s0 + $0xb0] sm:$0xff]
  %v37 = vld [vmem:[%s0 + $0xb8] sm:$0xff]
  %v38 = vld [vmem:[%s0 + $0xc0] sm:$0xff]
  %v39 = vld [vmem:[%s0 + $0xc8] sm:$0xff]
  %v40 = vld [vmem:[%s0 + $0xd0] sm:$0xff]
  %v41 = vld [vmem:[%s0 + $0xd8] sm:$0xff]
  %v42 = vld [vmem:[%s0 + $0xe0] sm:$0xff]
  %v43 = vld [vmem:[%s0 + $0xe8] sm:$0xff]
  %v44 = vld [vmem:[%s0 + $0xf0] sm:$0xff]
  %v45 = vld [vmem:[%s0 + $0xf8] sm:$0xff]
  %v46 = vld [vmem:[%s0 + $0x100] sm:$0xff]
  %v47 = vld [vmem:[%s0 + $0x108] sm:$0xff]
  %v48 = vld [vmem:[%s0 + $0x110] sm:$0xff]
  %v49 = vld [vmem:[%s0 + $0x118] sm:$0xff]
  %v50 = vld [vmem:[%s0 + $0x120] sm:$0xff]
  %v51 = vld [vmem:[%s0 + $0x128] sm:$0xff]
  %v52 = vld [vmem:[%s0 + $0x130] sm:$0xff]
  %v53 = vld [vmem:[%s0 + $0x138] sm:$0xff]
  %v54 = vld [vmem:[%s0 + $0x140] sm:$0xff]
  %v55 = vld [vmem:[%s0 + $0x148] sm:$0xff]
  %v56 = vld [vmem:[%s0 + $0x150] sm:$0xff]
  %v57 = vld [vmem:[%s0 + $0x158] sm:$0xff]
  %v58 = vld [vmem:[%s0 + $0x160] sm:$0xff]
  %v59 = vld [vmem:[%s0 + $0x168] sm:$0xff]
  %v60 = vld [vmem:[%s0 + $0x170] sm:$0xff]
  %v61 = vld [vmem:[%s0 + $0x178] sm:$0xff]
  %v62 = vld [vmem:[%s0 + $0x180] sm:$0xff]
  %v63 = vld [vmem:[%s0 + $0x188] sm:$0xff]
  %v64 = vld [vmem:[%s0 + $0x190] sm:$0xff]
  %v65 = vld [vmem:[%s0 + $0x198] sm:$0xff]
  %v66 = vld [vmem:[%s0 + $0x1a0] sm:$0xff]
  %v67 = vld [vmem:[%s0 + $0x1a8] sm:$0xff]
  %v68 = vld [vmem:[%s0 + $0x1b0] sm:$0xff]
  %v69 = vld [vmem:[%s0 + $0x1b8] sm:$0xff]
  %v70 = vld [vmem:[%s0 + $0x1c0] sm:$0xff]
  %v71 = vld [vmem:[%s0 + $0x1c8] sm:$0xff]
  %v72 = vld [vmem:[%s0 + $0x1d0] sm:$0xff]
  %v73 = vld [vmem:[%s0 + $0x1d8] sm:$0xff]
  %v74 = vld [vmem:[%s0 + $0x1e0] sm:$0xff]
  %v75 = vld [vmem:[%s0 + $0x1e8] sm:$0xff]
  %v76 = vld [vmem:[%s0 + $0x1f0] sm:$0xff]
  %v77 = vld [vmem:[%s0 + $0x1f8] sm:$0xff]
  %v78 = vld [vmem:[%s1] sm:$0x1]
  %v80 = vlaneseq
  %v81 = vshrl.u32 %v80, 7
  %v82 = vsub.s32 0, %v81
  %v83 = vrot.slane %v78, %v82
  %v85 = vmul.f32 %v14, %v83
  %v86 = vmul.f32 %v15, %v83
  %v87 = vmul.f32 %v16, %v83
  %v88 = vmul.f32 %v17, %v83
  %v89 = vmul.f32 %v18, %v83
  %v90 = vmul.f32 %v19, %v83
  %v91 = vmul.f32 %v20, %v83
  %v92 = vmul.f32 %v21, %v83
  %v93 = vmul.f32 %v22, %v83
  %v94 = vmul.f32 %v23, %v83
  %v95 = vmul.f32 %v24, %v83
  %v96 = vmul.f32 %v25, %v83
  %v97 = vmul.f32 %v26, %v83
  %v98 = vmul.f32 %v27, %v83
  %v99 = vmul.f32 %v28, %v83
  %v100 = vmul.f32 %v29, %v83
  %v101 = vmul.f32 %v30, %v83
  %v102 = vmul.f32 %v31, %v83
  %v103 = vmul.f32 %v32, %v83
  %v104 = vmul.f32 %v33, %v83
  %v105 = vmul.f32 %v34, %v83
  %v106 = vmul.f32 %v35, %v83
  %v107 = vmul.f32 %v36, %v83
  %v108 = vmul.f32 %v37, %v83
  %v109 = vmul.f32 %v38, %v83
  %v110 = vmul.f32 %v39, %v83
  %v111 = vmul.f32 %v40, %v83
  %v112 = vmul.f32 %v41, %v83
  %v113 = vmul.f32 %v42, %v83
  %v114 = vmul.f32 %v43, %v83
  %v115 = vmul.f32 %v44, %v83
  %v116 = vmul.f32 %v45, %v83
  %v117 = vmul.f32 %v46, %v83
  %v118 = vmul.f32 %v47, %v83
  %v119 = vmul.f32 %v48, %v83
  %v120 = vmul.f32 %v49, %v83
  %v121 = vmul.f32 %v50, %v83
  %v122 = vmul.f32 %v51, %v83
  %v123 = vmul.f32 %v52, %v83
  %v124 = vmul.f32 %v53, %v83
  %v125 = vmul.f32 %v54, %v83
  %v126 = vmul.f32 %v55, %v83
  %v127 = vmul.f32 %v56, %v83
  %v128 = vmul.f32 %v57, %v83
  %v129 = vmul.f32 %v58, %v83
  %v130 = vmul.f32 %v59, %v83
  %v131 = vmul.f32 %v60, %v83
  %v132 = vmul.f32 %v61, %v83
  %v133 = vmul.f32 %v62, %v83
  %v134 = vmul.f32 %v63, %v83
  %v135 = vmul.f32 %v64, %v83
  %v136 = vmul.f32 %v65, %v83
  %v137 = vmul.f32 %v66, %v83
  %v138 = vmul.f32 %v67, %v83
  %v139 = vmul.f32 %v68, %v83
  %v140 = vmul.f32 %v69, %v83
  %v141 = vmul.f32 %v70, %v83
  %v142 = vmul.f32 %v71, %v83
  %v143 = vmul.f32 %v72, %v83
  %v144 = vmul.f32 %v73, %v83
  %v145 = vmul.f32 %v74, %v83
  %v146 = vmul.f32 %v75, %v83
  %v147 = vmul.f32 %v76, %v83
  %v148 = vmul.f32 %v77, %v83
  %v149 = vld [vmem:[%s2] sm:$0x1]
  %v151 = vlaneseq
  %v152 = vshrl.u32 %v151, 7
  %v153 = vsub.s32 0, %v152
  %v154 = vrot.slane %v149, %v153
  %v156 = vadd.f32 %v85, %v154
  %v157 = vadd.f32 %v86, %v154
  %v158 = vadd.f32 %v87, %v154
  %v159 = vadd.f32 %v88, %v154
  %v160 = vadd.f32 %v89, %v154
  %v161 = vadd.f32 %v90, %v154
  %v162 = vadd.f32 %v91, %v154
  %v163 = vadd.f32 %v92, %v154
  %v164 = vadd.f32 %v93, %v154
  %v165 = vadd.f32 %v94, %v154
  %v166 = vadd.f32 %v95, %v154
  %v167 = vadd.f32 %v96, %v154
  %v168 = vadd.f32 %v97, %v154
  %v169 = vadd.f32 %v98, %v154
  %v170 = vadd.f32 %v99, %v154
  %v171 = vadd.f32 %v100, %v154
  %v172 = vadd.f32 %v101, %v154
  %v173 = vadd.f32 %v102, %v154
  %v174 = vadd.f32 %v103, %v154
  %v175 = vadd.f32 %v104, %v154
  %v176 = vadd.f32 %v105, %v154
  %v177 = vadd.f32 %v106, %v154
  %v178 = vadd.f32 %v107, %v154
  %v179 = vadd.f32 %v108, %v154
  %v180 = vadd.f32 %v109, %v154
  %v181 = vadd.f32 %v110, %v154
  %v182 = vadd.f32 %v111, %v154
  %v183 = vadd.f32 %v112, %v154
  %v184 = vadd.f32 %v113, %v154
  %v185 = vadd.f32 %v114, %v154
  %v186 = vadd.f32 %v115, %v154
  %v187 = vadd.f32 %v116, %v154
  %v188 = vadd.f32 %v117, %v154
  %v189 = vadd.f32 %v118, %v154
  %v190 = vadd.f32 %v119, %v154
  %v191 = vadd.f32 %v120, %v154
  %v192 = vadd.f32 %v121, %v154
  %v193 = vadd.f32 %v122, %v154
  %v194 = vadd.f32 %v123, %v154
  %v195 = vadd.f32 %v124, %v154
  %v196 = vadd.f32 %v125, %v154
  %v197 = vadd.f32 %v126, %v154
  %v198 = vadd.f32 %v127, %v154
  %v199 = vadd.f32 %v128, %v154
  %v200 = vadd.f32 %v129, %v154
  %v201 = vadd.f32 %v130, %v154
  %v202 = vadd.f32 %v131, %v154
  %v203 = vadd.f32 %v132, %v154
  %v204 = vadd.f32 %v133, %v154
  %v205 = vadd.f32 %v134, %v154
  %v206 = vadd.f32 %v135, %v154
  %v207 = vadd.f32 %v136, %v154
  %v208 = vadd.f32 %v137, %v154
  %v209 = vadd.f32 %v138, %v154
  %v210 = vadd.f32 %v139, %v154
  %v211 = vadd.f32 %v140, %v154
  %v212 = vadd.f32 %v141, %v154
  %v213 = vadd.f32 %v142, %v154
  %v214 = vadd.f32 %v143, %v154
  %v215 = vadd.f32 %v144, %v154
  %v216 = vadd.f32 %v145, %v154
  %v217 = vadd.f32 %v146, %v154
  %v218 = vadd.f32 %v147, %v154
  %v219 = vadd.f32 %v148, %v154
  %vm220 = vcmp.ge.f32.partialorder %v156, 0.0
  %vm221 = vcmp.ge.f32.partialorder %v157, 0.0
  %vm222 = vcmp.ge.f32.partialorder %v158, 0.0
  %vm223 = vcmp.ge.f32.partialorder %v159, 0.0
  %vm224 = vcmp.ge.f32.partialorder %v160, 0.0
  %vm225 = vcmp.ge.f32.partialorder %v161, 0.0
  %vm226 = vcmp.ge.f32.partialorder %v162, 0.0
  %vm227 = vcmp.ge.f32.partialorder %v163, 0.0
  %vm228 = vcmp.ge.f32.partialorder %v164, 0.0
  %vm229 = vcmp.ge.f32.partialorder %v165, 0.0
  %vm230 = vcmp.ge.f32.partialorder %v166, 0.0
  %vm231 = vcmp.ge.f32.partialorder %v167, 0.0
  %vm232 = vcmp.ge.f32.partialorder %v168, 0.0
  %vm233 = vcmp.ge.f32.partialorder %v169, 0.0
  %vm234 = vcmp.ge.f32.partialorder %v170, 0.0
  %vm235 = vcmp.ge.f32.partialorder %v171, 0.0
  %vm236 = vcmp.ge.f32.partialorder %v172, 0.0
  %vm237 = vcmp.ge.f32.partialorder %v173, 0.0
  %vm238 = vcmp.ge.f32.partialorder %v174, 0.0
  %vm239 = vcmp.ge.f32.partialorder %v175, 0.0
  %vm240 = vcmp.ge.f32.partialorder %v176, 0.0
  %vm241 = vcmp.ge.f32.partialorder %v177, 0.0
  %vm242 = vcmp.ge.f32.partialorder %v178, 0.0
  %vm243 = vcmp.ge.f32.partialorder %v179, 0.0
  %vm244 = vcmp.ge.f32.partialorder %v180, 0.0
  %vm245 = vcmp.ge.f32.partialorder %v181, 0.0
  %vm246 = vcmp.ge.f32.partialorder %v182, 0.0
  %vm247 = vcmp.ge.f32.partialorder %v183, 0.0
  %vm248 = vcmp.ge.f32.partialorder %v184, 0.0
  %vm249 = vcmp.ge.f32.partialorder %v185, 0.0
  %vm250 = vcmp.ge.f32.partialorder %v186, 0.0
  %vm251 = vcmp.ge.f32.partialorder %v187, 0.0
  %vm252 = vcmp.ge.f32.partialorder %v188, 0.0
  %vm253 = vcmp.ge.f32.partialorder %v189, 0.0
  %vm254 = vcmp.ge.f32.partialorder %v190, 0.0
  %vm255 = vcmp.ge.f32.partialorder %v191, 0.0
  %vm256 = vcmp.ge.f32.partialorder %v192, 0.0
  %vm257 = vcmp.ge.f32.partialorder %v193, 0.0
  %vm258 = vcmp.ge.f32.partialorder %v194, 0.0
  %vm259 = vcmp.ge.f32.partialorder %v195, 0.0
  %vm260 = vcmp.ge.f32.partialorder %v196, 0.0
  %vm261 = vcmp.ge.f32.partialorder %v197, 0.0
  %vm262 = vcmp.ge.f32.partialorder %v198, 0.0
  %vm263 = vcmp.ge.f32.partialorder %v199, 0.0
  %vm264 = vcmp.ge.f32.partialorder %v200, 0.0
  %vm265 = vcmp.ge.f32.partialorder %v201, 0.0
  %vm266 = vcmp.ge.f32.partialorder %v202, 0.0
  %vm267 = vcmp.ge.f32.partialorder %v203, 0.0
  %vm268 = vcmp.ge.f32.partialorder %v204, 0.0
  %vm269 = vcmp.ge.f32.partialorder %v205, 0.0
  %vm270 = vcmp.ge.f32.partialorder %v206, 0.0
  %vm271 = vcmp.ge.f32.partialorder %v207, 0.0
  %vm272 = vcmp.ge.f32.partialorder %v208, 0.0
  %vm273 = vcmp.ge.f32.partialorder %v209, 0.0
  %vm274 = vcmp.ge.f32.partialorder %v210, 0.0
  %vm275 = vcmp.ge.f32.partialorder %v211, 0.0
  %vm276 = vcmp.ge.f32.partialorder %v212, 0.0
  %vm277 = vcmp.ge.f32.partialorder %v213, 0.0
  %vm278 = vcmp.ge.f32.partialorder %v214, 0.0
  %vm279 = vcmp.ge.f32.partialorder %v215, 0.0
  %vm280 = vcmp.ge.f32.partialorder %v216, 0.0
  %vm281 = vcmp.ge.f32.partialorder %v217, 0.0
  %vm282 = vcmp.ge.f32.partialorder %v218, 0.0
  %vm283 = vcmp.ge.f32.partialorder %v219, 0.0
  %v284 = vmul.f32 %v156, 0.01
  %v285 = vmul.f32 %v157, 0.01
  %v286 = vmul.f32 %v158, 0.01
  %v287 = vmul.f32 %v159, 0.01
  %v288 = vmul.f32 %v160, 0.01
  %v289 = vmul.f32 %v161, 0.01
  %v290 = vmul.f32 %v162, 0.01
  %v291 = vmul.f32 %v163, 0.01
  %v292 = vmul.f32 %v164, 0.01
  %v293 = vmul.f32 %v165, 0.01
  %v294 = vmul.f32 %v166, 0.01
  %v295 = vmul.f32 %v167, 0.01
  %v296 = vmul.f32 %v168, 0.01
  %v297 = vmul.f32 %v169, 0.01
  %v298 = vmul.f32 %v170, 0.01
  %v299 = vmul.f32 %v171, 0.01
  %v300 = vmul.f32 %v172, 0.01
  %v301 = vmul.f32 %v173, 0.01
  %v302 = vmul.f32 %v174, 0.01
  %v303 = vmul.f32 %v175, 0.01
  %v304 = vmul.f32 %v176, 0.01
  %v305 = vmul.f32 %v177, 0.01
  %v306 = vmul.f32 %v178, 0.01
  %v307 = vmul.f32 %v179, 0.01
  %v308 = vmul.f32 %v180, 0.01
  %v309 = vmul.f32 %v181, 0.01
  %v310 = vmul.f32 %v182, 0.01
  %v311 = vmul.f32 %v183, 0.01
  %v312 = vmul.f32 %v184, 0.01
  %v313 = vmul.f32 %v185, 0.01
  %v314 = vmul.f32 %v186, 0.01
  %v315 = vmul.f32 %v187, 0.01
  %v316 = vmul.f32 %v188, 0.01
  %v317 = vmul.f32 %v189, 0.01
  %v318 = vmul.f32 %v190, 0.01
  %v319 = vmul.f32 %v191, 0.01
  %v320 = vmul.f32 %v192, 0.01
  %v321 = vmul.f32 %v193, 0.01
  %v322 = vmul.f32 %v194, 0.01
  %v323 = vmul.f32 %v195, 0.01
  %v324 = vmul.f32 %v196, 0.01
  %v325 = vmul.f32 %v197, 0.01
  %v326 = vmul.f32 %v198, 0.01
  %v327 = vmul.f32 %v199, 0.01
  %v328 = vmul.f32 %v200, 0.01
  %v329 = vmul.f32 %v201, 0.01
  %v330 = vmul.f32 %v202, 0.01
  %v331 = vmul.f32 %v203, 0.01
  %v332 = vmul.f32 %v204, 0.01
  %v333 = vmul.f32 %v205, 0.01
  %v334 = vmul.f32 %v206, 0.01
  %v335 = vmul.f32 %v207, 0.01
  %v336 = vmul.f32 %v208, 0.01
  %v337 = vmul.f32 %v209, 0.01
  %v338 = vmul.f32 %v210, 0.01
  %v339 = vmul.f32 %v211, 0.01
  %v340 = vmul.f32 %v212, 0.01
  %v341 = vmul.f32 %v213, 0.01
  %v342 = vmul.f32 %v214, 0.01
  %v343 = vmul.f32 %v215, 0.01
  %v344 = vmul.f32 %v216, 0.01
  %v345 = vmul.f32 %v217, 0.01
  %v346 = vmul.f32 %v218, 0.01
  %v347 = vmul.f32 %v219, 0.01
  %v348 = vsel %vm220, %v156, %v284
  %v349 = vsel %vm221, %v157, %v285
  %v350 = vsel %vm222, %v158, %v286
  %v351 = vsel %vm223, %v159, %v287
  %v352 = vsel %vm224, %v160, %v288
  %v353 = vsel %vm225, %v161, %v289
  %v354 = vsel %vm226, %v162, %v290
  %v355 = vsel %vm227, %v163, %v291
  %v356 = vsel %vm228, %v164, %v292
  %v357 = vsel %vm229, %v165, %v293
  %v358 = vsel %vm230, %v166, %v294
  %v359 = vsel %vm231, %v167, %v295
  %v360 = vsel %vm232, %v168, %v296
  %v361 = vsel %vm233, %v169, %v297
  %v362 = vsel %vm234, %v170, %v298
  %v363 = vsel %vm235, %v171, %v299
  %v364 = vsel %vm236, %v172, %v300
  %v365 = vsel %vm237, %v173, %v301
  %v366 = vsel %vm238, %v174, %v302
  %v367 = vsel %vm239, %v175, %v303
  %v368 = vsel %vm240, %v176, %v304
  %v369 = vsel %vm241, %v177, %v305
  %v370 = vsel %vm242, %v178, %v306
  %v371 = vsel %vm243, %v179, %v307
  %v372 = vsel %vm244, %v180, %v308
  %v373 = vsel %vm245, %v181, %v309
  %v374 = vsel %vm246, %v182, %v310
  %v375 = vsel %vm247, %v183, %v311
  %v376 = vsel %vm248, %v184, %v312
  %v377 = vsel %vm249, %v185, %v313
  %v378 = vsel %vm250, %v186, %v314
  %v379 = vsel %vm251, %v187, %v315
  %v380 = vsel %vm252, %v188, %v316
  %v381 = vsel %vm253, %v189, %v317
  %v382 = vsel %vm254, %v190, %v318
  %v383 = vsel %vm255, %v191, %v319
  %v384 = vsel %vm256, %v192, %v320
  %v385 = vsel %vm257, %v193, %v321
  %v386 = vsel %vm258, %v194, %v322
  %v387 = vsel %vm259, %v195, %v323
  %v388 = vsel %vm260, %v196, %v324
  %v389 = vsel %vm261, %v197, %v325
  %v390 = vsel %vm262, %v198, %v326
  %v391 = vsel %vm263, %v199, %v327
  %v392 = vsel %vm264, %v200, %v328
  %v393 = vsel %vm265, %v201, %v329
  %v394 = vsel %vm266, %v202, %v330
  %v395 = vsel %vm267, %v203, %v331
  %v396 = vsel %vm268, %v204, %v332
  %v397 = vsel %vm269, %v205, %v333
  %v398 = vsel %vm270, %v206, %v334
  %v399 = vsel %vm271, %v207, %v335
  %v400 = vsel %vm272, %v208, %v336
  %v401 = vsel %vm273, %v209, %v337
  %v402 = vsel %vm274, %v210, %v338
  %v403 = vsel %vm275, %v211, %v339
  %v404 = vsel %vm276, %v212, %v340
  %v405 = vsel %vm277, %v213, %v341
  %v406 = vsel %vm278, %v214, %v342
  %v407 = vsel %vm279, %v215, %v343
  %v408 = vsel %vm280, %v216, %v344
  %v409 = vsel %vm281, %v217, %v345
  %v410 = vsel %vm282, %v218, %v346
  %v411 = vsel %vm283, %v219, %v347
  %412 = vst [vmem:[%s3] sm:$0xff] %v348
  %413 = vst [vmem:[%s3 + $0x8] sm:$0xff] %v349
  %414 = vst [vmem:[%s3 + $0x10] sm:$0xff] %v350
  %415 = vst [vmem:[%s3 + $0x18] sm:$0xff] %v351
  %416 = vst [vmem:[%s3 + $0x20] sm:$0xff] %v352
  %417 = vst [vmem:[%s3 + $0x28] sm:$0xff] %v353
  %418 = vst [vmem:[%s3 + $0x30] sm:$0xff] %v354
  %419 = vst [vmem:[%s3 + $0x38] sm:$0xff] %v355
  %420 = vst [vmem:[%s3 + $0x40] sm:$0xff] %v356
  %421 = vst [vmem:[%s3 + $0x48] sm:$0xff] %v357
  %422 = vst [vmem:[%s3 + $0x50] sm:$0xff] %v358
  %423 = vst [vmem:[%s3 + $0x58] sm:$0xff] %v359
  %424 = vst [vmem:[%s3 + $0x60] sm:$0xff] %v360
  %425 = vst [vmem:[%s3 + $0x68] sm:$0xff] %v361
  %426 = vst [vmem:[%s3 + $0x70] sm:$0xff] %v362
  %427 = vst [vmem:[%s3 + $0x78] sm:$0xff] %v363
  %428 = vst [vmem:[%s3 + $0x80] sm:$0xff] %v364
  %429 = vst [vmem:[%s3 + $0x88] sm:$0xff] %v365
  %430 = vst [vmem:[%s3 + $0x90] sm:$0xff] %v366
  %431 = vst [vmem:[%s3 + $0x98] sm:$0xff] %v367
  %432 = vst [vmem:[%s3 + $0xa0] sm:$0xff] %v368
  %433 = vst [vmem:[%s3 + $0xa8] sm:$0xff] %v369
  %434 = vst [vmem:[%s3 + $0xb0] sm:$0xff] %v370
  %435 = vst [vmem:[%s3 + $0xb8] sm:$0xff] %v371
  %436 = vst [vmem:[%s3 + $0xc0] sm:$0xff] %v372
  %437 = vst [vmem:[%s3 + $0xc8] sm:$0xff] %v373
  %438 = vst [vmem:[%s3 + $0xd0] sm:$0xff] %v374
  %439 = vst [vmem:[%s3 + $0xd8] sm:$0xff] %v375
  %440 = vst [vmem:[%s3 + $0xe0] sm:$0xff] %v376
  %441 = vst [vmem:[%s3 + $0xe8] sm:$0xff] %v377
  %442 = vst [vmem:[%s3 + $0xf0] sm:$0xff] %v378
  %443 = vst [vmem:[%s3 + $0xf8] sm:$0xff] %v379
  %444 = vst [vmem:[%s3 + $0x100] sm:$0xff] %v380
  %445 = vst [vmem:[%s3 + $0x108] sm:$0xff] %v381
  %446 = vst [vmem:[%s3 + $0x110] sm:$0xff] %v382
  %447 = vst [vmem:[%s3 + $0x118] sm:$0xff] %v383
  %448 = vst [vmem:[%s3 + $0x120] sm:$0xff] %v384
  %449 = vst [vmem:[%s3 + $0x128] sm:$0xff] %v385
  %450 = vst [vmem:[%s3 + $0x130] sm:$0xff] %v386
  %451 = vst [vmem:[%s3 + $0x138] sm:$0xff] %v387
  %452 = vst [vmem:[%s3 + $0x140] sm:$0xff] %v388
  %453 = vst [vmem:[%s3 + $0x148] sm:$0xff] %v389
  %454 = vst [vmem:[%s3 + $0x150] sm:$0xff] %v390
  %455 = vst [vmem:[%s3 + $0x158] sm:$0xff] %v391
  %456 = vst [vmem:[%s3 + $0x160] sm:$0xff] %v392
  %457 = vst [vmem:[%s3 + $0x168] sm:$0xff] %v393
  %458 = vst [vmem:[%s3 + $0x170] sm:$0xff] %v394
  %459 = vst [vmem:[%s3 + $0x178] sm:$0xff] %v395
  %460 = vst [vmem:[%s3 + $0x180] sm:$0xff] %v396
  %461 = vst [vmem:[%s3 + $0x188] sm:$0xff] %v397
  %462 = vst [vmem:[%s3 + $0x190] sm:$0xff] %v398
  %463 = vst [vmem:[%s3 + $0x198] sm:$0xff] %v399
  %464 = vst [vmem:[%s3 + $0x1a0] sm:$0xff] %v400
  %465 = vst [vmem:[%s3 + $0x1a8] sm:$0xff] %v401
  %466 = vst [vmem:[%s3 + $0x1b0] sm:$0xff] %v402
  %467 = vst [vmem:[%s3 + $0x1b8] sm:$0xff] %v403
  %468 = vst [vmem:[%s3 + $0x1c0] sm:$0xff] %v404
  %469 = vst [vmem:[%s3 + $0x1c8] sm:$0xff] %v405
  %470 = vst [vmem:[%s3 + $0x1d0] sm:$0xff] %v406
  %471 = vst [vmem:[%s3 + $0x1d8] sm:$0xff] %v407
  %472 = vst [vmem:[%s3 + $0x1e0] sm:$0xff] %v408
  %473 = vst [vmem:[%s3 + $0x1e8] sm:$0xff] %v409
  %474 = vst [vmem:[%s3 + $0x1f0] sm:$0xff] %v410
  %475 = vst [vmem:[%s3 + $0x1f8] sm:$0xff] %v411
  // Predicated region
  $region14: #{double_conv.7} parent=0 // pred_check
    _
  $region15: #{double_conv.7} parent=0 // pred_check_branch
    %477 = sbr.rel (0) target = $region17
  $region16: #{double_conv.7} parent=0 // pred_region
    _
  $region17: #{double_conv.7} parent=0 // pred_fallthru
    _
  // Predicated region
  $region18: #{double_conv.7} parent=0 // pred_check
    _
  $region19: #{double_conv.7} parent=0 // pred_check_branch
    %479 = sbr.rel (0) target = $region21
  $region20: #{double_conv.7} parent=0 // pred_region
    _
  $region21: #{double_conv.7} parent=0 // pred_fallthru
    _

// kernel: double_conv.4
$region0: #{double_conv.4}
  #allocation0 [shape = 'u32[]', space=smem, size = 0x4, offset = 0x4, fixed_abs, tag = 'smem constant byte address 0x4 - core index']
  #allocation1 [shape = 'u32[144,128]{1,0:T(1,128)}', space=vmem, size = 0x12000, scoped, tag = 'internal scratch']
  #allocation2 [shape = 'f32[1,128]{1,0:T(1,128)}', space=vmem, size = 0x200, scoped, tag = 'scratch operand']
  #allocation3 [shape = 'f32[1,128]{1,0:T(1,128)}', space=vmem, size = 0x200, scoped, tag = 'scratch operand']
  %s0 = inlined_call_operand.vmem [shape: bf16[2,18,18,128], index: 0, kind: input, shape index: {}, may-alias: {0,1,2}]
  %s1 = inlined_call_operand.vmem [shape: bf16[2,18,18,128], index: 1, kind: input, shape index: {}, may-alias: {0,1,2}]
  %s2 = inlined_call_operand.vmem [shape: bf16[2,18,18,128], index: 2, kind: input, shape index: {}, may-alias: {0,1,2}]
  %s3 = inlined_call_operand.vmem [shape: bf16[1152,128], index: 3, kind: input, shape index: {}]
  %s4 = inlined_call_operand.vmem [shape: f32[2,16,16,128], index: 4, kind: output, shape index: {0}]
  %s5 = inlined_call_operand.vmem [shape: f32[1,128], index: 5, kind: output, shape index: {1}]
  %s6 = inlined_call_operand.vmem [shape: f32[1,128], index: 6, kind: output, shape index: {2}]
  %7 = xla_tuple %s4, %s5, %s6
  %s8 = sld [smem:[#allocation0]]
  $region73: #{double_conv.4} parent=0
    _
  %s10 = ssub.s32 1, %s8
  %s11 = scalar_select 0, %s10, %s8
  loop: start=0, step=1, limit=34
  $region2: #{double_conv.4} parent=0 // loop_pre_header
    _
  $region3: #{double_conv.4} parent=0 // loop_header
    %s13 = sphi 0, %s17
    %p14 = scmp.ge.s32.totalorder %s13, 34
    %s20 = sphi 0, %s32
    %s21 = sphi 0, %s28
    %s22 = sphi 0, %s20
    %s23 = sphi 0, %s21
    %s24 = sphi 0, %s22
    %s25 = sphi 0, %s23
    %s37 = sphi 0, %s39
    %s40 = sphi 0, %s37
    %s41 = sphi 0, %s40
    %s57 = sphi 0, %s41
    %s67 = sphi 0, %s69
    %s70 = sphi 0, %s67
    %s71 = sphi 0, %s70
    %s87 = sphi 0, %s71
    %s97 = sphi 0, %s99
    %s100 = sphi 0, %s97
    %s101 = sphi 0, %s100
    %s117 = sphi 0, %s101
    %s121 = sphi 0, %s121
    %s123 = sphi 0, %s121
    %s124 = sphi 0, %s123
    %s138 = sphi 0, %s124
    %s146 = sphi 0, %s148
    %s149 = sphi 0, %s146
    %s150 = sphi 0, %s149
    %s166 = sphi 0, %s150
    %s170 = sphi 0, %s170
    %s172 = sphi 0, %s170
    %s173 = sphi 0, %s172
    %s187 = sphi 0, %s173
    %s191 = sphi 0, %s191
    %s193 = sphi 0, %s191
    %s194 = sphi 0, %s193
    %s208 = sphi 0, %s194
  $region4: #{double_conv.4} parent=0 // loop_header_branch
    %16 = sbr.rel (%p14) target = $region8
  $region5: #{double_conv.4} parent=0 // loop_body
    %s18 = ssub.s32 %s13, 1
    %s19 = ssub.s32 %s13, 2
    %s26 = sadd.s32 1, %s21
    %p27 = scmp.ge.s32.totalorder %s26, 16
    %s28 = scalar_select %p27, 0, %s26
    %s29 = sadd.s32 1, %s20
    %s30 = scalar_select %p27, %s29, %s20
    %p31 = scmp.ge.s32.totalorder %s30, 2
    %s32 = scalar_select %p31, 0, %s30
    %s33 = ssub.s32 %s20, %s32
    %s34 = ssub.s32 %s21, %s28
    %s35 = sor.u32 %s33, %s34
    %p36 = scmp.eq.s32.totalorder %s35, 0
    %s38 = sadd.s32 %s37, 1
    %s39 = scalar_select %p36, %s37, %s38
    %p42 = pneg %p36
    %p43 = scmp.eq.s32.totalorder %s13, 31
    %p44 = por %p42, %p43
    %p45 = scmp.ne.s32.totalorder %s37, %s40
    %p46 = scmp.eq.s32.totalorder %s13, 0
    %p47 = por %p45, %p46
    %p48 = scmp.ne.s32.totalorder %s37, %s40
    %p49 = scmp.eq.s32.totalorder %s18, 31
    %p50 = por %p48, %p49
    %p51 = scmp.ne.s32.totalorder %s40, %s41
    %p52 = scmp.eq.s32.totalorder %s18, 0
    %p53 = por %p51, %p52
    %p54 = scmp.ne.s32.totalorder %s40, %s41
    %p55 = scmp.eq.s32.totalorder %s19, 31
    %p56 = por %p54, %p55
    %p58 = scmp.ne.s32.totalorder %s41, %s57
    %p59 = scmp.eq.s32.totalorder %s19, 0
    %p60 = por %p58, %p59
    %s61 = sadd.s32 %s21, 1
    %s62 = sadd.s32 %s28, 1
    %s63 = ssub.s32 %s20, %s32
    %s64 = ssub.s32 %s61, %s62
    %s65 = sor.u32 %s63, %s64
    %p66 = scmp.eq.s32.totalorder %s65, 0
    %s68 = sadd.s32 %s67, 1
    %s69 = scalar_select %p66, %s67, %s68
    %p72 = pneg %p66
    %p73 = scmp.eq.s32.totalorder %s13, 31
    %p74 = por %p72, %p73
    %p75 = scmp.ne.s32.totalorder %s67, %s70
    %p76 = scmp.eq.s32.totalorder %s13, 0
    %p77 = por %p75, %p76
    %p78 = scmp.ne.s32.totalorder %s67, %s70
    %p79 = scmp.eq.s32.totalorder %s18, 31
    %p80 = por %p78, %p79
    %p81 = scmp.ne.s32.totalorder %s70, %s71
    %p82 = scmp.eq.s32.totalorder %s18, 0
    %p83 = por %p81, %p82
    %p84 = scmp.ne.s32.totalorder %s70, %s71
    %p85 = scmp.eq.s32.totalorder %s19, 31
    %p86 = por %p84, %p85
    %p88 = scmp.ne.s32.totalorder %s71, %s87
    %p89 = scmp.eq.s32.totalorder %s19, 0
    %p90 = por %p88, %p89
    %s91 = sadd.s32 %s21, 2
    %s92 = sadd.s32 %s28, 2
    %s93 = ssub.s32 %s20, %s32
    %s94 = ssub.s32 %s91, %s92
    %s95 = sor.u32 %s93, %s94
    %p96 = scmp.eq.s32.totalorder %s95, 0
    %s98 = sadd.s32 %s97, 1
    %s99 = scalar_select %p96, %s97, %s98
    %p102 = pneg %p96
    %p103 = scmp.eq.s32.totalorder %s13, 31
    %p104 = por %p102, %p103
    %p105 = scmp.ne.s32.totalorder %s97, %s100
    %p106 = scmp.eq.s32.totalorder %s13, 0
    %p107 = por %p105, %p106
    %p108 = scmp.ne.s32.totalorder %s97, %s100
    %p109 = scmp.eq.s32.totalorder %s18, 31
    %p110 = por %p108, %p109
    %p111 = scmp.ne.s32.totalorder %s100, %s101
    %p112 = scmp.eq.s32.totalorder %s18, 0
    %p113 = por %p111, %p112
    %p114 = scmp.ne.s32.totalorder %s100, %s101
    %p115 = scmp.eq.s32.totalorder %s19, 31
    %p116 = por %p114, %p115
    %p118 = scmp.ne.s32.totalorder %s101, %s117
    %p119 = scmp.eq.s32.totalorder %s19, 0
    %p120 = por %p118, %p119
    %s122 = sadd.s32 %s121, 1
    %p125 = scmp.eq.s32.totalorder %s13, 31
    %p126 = scmp.ne.s32.totalorder %s121, %s123
    %p127 = scmp.eq.s32.totalorder %s13, 0
    %p128 = por %p126, %p127
    %p129 = scmp.ne.s32.totalorder %s121, %s123
    %p130 = scmp.eq.s32.totalorder %s18, 31
    %p131 = por %p129, %p130
    %p132 = scmp.ne.s32.totalorder %s123, %s124
    %p133 = scmp.eq.s32.totalorder %s18, 0
    %p134 = por %p132, %p133
    %p135 = scmp.ne.s32.totalorder %s123, %s124
    %p136 = scmp.eq.s32.totalorder %s19, 31
    %p137 = por %p135, %p136
    %p139 = scmp.ne.s32.totalorder %s124, %s138
    %p140 = scmp.eq.s32.totalorder %s19, 0
    %p141 = por %p139, %p140
    %s142 = ssub.s32 %s20, %s32
    %s143 = ssub.s32 %s21, %s28
    %s144 = sor.u32 %s142, %s143
    %p145 = scmp.eq.s32.totalorder %s144, 0
    %s147 = sadd.s32 %s146, 1
    %s148 = scalar_select %p145, %s146, %s147
    %p151 = pneg %p145
    %p152 = scmp.eq.s32.totalorder %s13, 31
    %p153 = por %p151, %p152
    %p154 = scmp.ne.s32.totalorder %s146, %s149
    %p155 = scmp.eq.s32.totalorder %s13, 0
    %p156 = por %p154, %p155
    %p157 = scmp.ne.s32.totalorder %s146, %s149
    %p158 = scmp.eq.s32.totalorder %s18, 31
    %p159 = por %p157, %p158
    %p160 = scmp.ne.s32.totalorder %s149, %s150
    %p161 = scmp.eq.s32.totalorder %s18, 0
    %p162 = por %p160, %p161
    %p163 = scmp.ne.s32.totalorder %s149, %s150
    %p164 = scmp.eq.s32.totalorder %s19, 31
    %p165 = por %p163, %p164
    %p167 = scmp.ne.s32.totalorder %s150, %s166
    %p168 = scmp.eq.s32.totalorder %s19, 0
    %p169 = por %p167, %p168
    %s171 = sadd.s32 %s170, 1
    %p174 = scmp.eq.s32.totalorder %s13, 31
    %p175 = scmp.ne.s32.totalorder %s170, %s172
    %p176 = scmp.eq.s32.totalorder %s13, 0
    %p177 = por %p175, %p176
    %p178 = scmp.ne.s32.totalorder %s170, %s172
    %p179 = scmp.eq.s32.totalorder %s18, 31
    %p180 = por %p178, %p179
    %p181 = scmp.ne.s32.totalorder %s172, %s173
    %p182 = scmp.eq.s32.totalorder %s18, 0
    %p183 = por %p181, %p182
    %p184 = scmp.ne.s32.totalorder %s172, %s173
    %p185 = scmp.eq.s32.totalorder %s19, 31
    %p186 = por %p184, %p185
    %p188 = scmp.ne.s32.totalorder %s173, %s187
    %p189 = scmp.eq.s32.totalorder %s19, 0
    %p190 = por %p188, %p189
    %s192 = sadd.s32 %s191, 1
    %p195 = scmp.eq.s32.totalorder %s13, 31
    %p196 = scmp.ne.s32.totalorder %s191, %s193
    %p197 = scmp.eq.s32.totalorder %s13, 0
    %p198 = por %p196, %p197
    %p199 = scmp.ne.s32.totalorder %s191, %s193
    %p200 = scmp.eq.s32.totalorder %s18, 31
    %p201 = por %p199, %p200
    %p202 = scmp.ne.s32.totalorder %s193, %s194
    %p203 = scmp.eq.s32.totalorder %s18, 0
    %p204 = por %p202, %p203
    %p205 = scmp.ne.s32.totalorder %s193, %s194
    %p206 = scmp.eq.s32.totalorder %s19, 31
    %p207 = por %p205, %p206
    %p209 = scmp.ne.s32.totalorder %s194, %s208
    %p210 = scmp.eq.s32.totalorder %s19, 0
    %p211 = por %p209, %p210
    %p212 = scmp.le.s32.totalorder 1, %s13
    %p213 = scmp.lt.s32.totalorder %s13, 33
    %p214 = pnand %p212, %p213
    %p215 = pneg %p214
    // Predicated region
    $region9: #{double_conv.4} parent=5 // pred_check
      _
    $region10: #{double_conv.4} parent=5 // pred_check_branch
      %217 = sbr.rel (%p214) target = $region12
    $region11: #{double_conv.4} parent=5 // pred_region
      %s218 = ssub.s32 %s13, 1
      // Predicated region
      $region13: #{double_conv.4} parent=11 // pred_check
        %p219 = pneg %p134
      $region14: #{double_conv.4} parent=11 // pred_check_branch
        %221 = sbr.rel (%p219) target = $region16
      $region15: #{double_conv.4} parent=11 // pred_region
        _
      $region16: #{double_conv.4} parent=11 // pred_fallthru
        _
    $region12: #{double_conv.4} parent=5 // pred_fallthru
      _
    %p222 = scmp.lt.s32.totalorder %s13, 32
    // Predicated region
    $region17: #{double_conv.4} parent=5 // pred_check
      %p223 = pneg %p222
    $region18: #{double_conv.4} parent=5 // pred_check_branch
      %225 = sbr.rel (%p223) target = $region20
    $region19: #{double_conv.4} parent=5 // pred_region
      // Predicated region
      $region21: #{double_conv.4} parent=19 // pred_check
        %p226 = pneg %p47
      $region22: #{double_conv.4} parent=19 // pred_check_branch
        %228 = sbr.rel (%p226) target = $region24
      $region23: #{double_conv.4} parent=19 // pred_region
        %p229 = scmp.lt.s32.totalorder %s20, 1
        %s230 = scalar_select %p229, %s20, 1
        %p231 = scmp.lt.s32.totalorder %s21, 17
        %s232 = scalar_select %p231, %s21, 17
        %s233 = smul.addr %s232, 3
        %s234 = smul.addr %s230, 54
        %s235 = sadd.s32 %s233, %s234
        %s236 = smul.addr %s235, 4
        %s237 = scalar_lea.vmem %s0, %s236
      $region24: #{double_conv.4} parent=19 // pred_fallthru
        _
      // Predicated region
      $region25: #{double_conv.4} parent=19 // pred_check
        %p238 = pneg %p77
      $region26: #{double_conv.4} parent=19 // pred_check_branch
        %240 = sbr.rel (%p238) target = $region28
      $region27: #{double_conv.4} parent=19 // pred_region
        %s241 = sadd.s32 %s21, 1
        %p242 = scmp.lt.s32.totalorder %s20, 1
        %s243 = scalar_select %p242, %s20, 1
        %p244 = scmp.lt.s32.totalorder %s241, 17
        %s245 = scalar_select %p244, %s241, 17
        %s246 = smul.addr %s245, 3
        %s247 = smul.addr %s243, 54
        %s248 = sadd.s32 %s246, %s247
        %s249 = smul.addr %s248, 4
        %s250 = scalar_lea.vmem %s1, %s249
        %s251 = sadd.s32 %s21, 1
      $region28: #{double_conv.4} parent=19 // pred_fallthru
        _
      // Predicated region
      $region29: #{double_conv.4} parent=19 // pred_check
        %p252 = pneg %p107
      $region30: #{double_conv.4} parent=19 // pred_check_branch
        %254 = sbr.rel (%p252) target = $region32
      $region31: #{double_conv.4} parent=19 // pred_region
        %s255 = sadd.s32 %s21, 2
        %p256 = scmp.lt.s32.totalorder %s20, 1
        %s257 = scalar_select %p256, %s20, 1
        %p258 = scmp.lt.s32.totalorder %s255, 17
        %s259 = scalar_select %p258, %s255, 17
        %s260 = smul.addr %s259, 3
        %s261 = smul.addr %s257, 54
        %s262 = sadd.s32 %s260, %s261
        %s263 = smul.addr %s262, 4
        %s264 = scalar_lea.vmem %s2, %s263
        %s265 = sadd.s32 %s21, 2
      $region32: #{double_conv.4} parent=19 // pred_fallthru
        _
    $region20: #{double_conv.4} parent=5 // pred_fallthru
      _
    %p266 = scmp.le.s32.totalorder 1, %s13
    %p267 = scmp.lt.s32.totalorder %s13, 33
    %p268 = pnand %p266, %p267
    %p269 = pneg %p268
    // Predicated region
    $region33: #{double_conv.4} parent=5 // pred_check
      _
    $region34: #{double_conv.4} parent=5 // pred_check_branch
      %271 = sbr.rel (%p268) target = $region36
    $region35: #{double_conv.4} parent=5 // pred_region
      %s272 = ssub.s32 %s13, 1
      %p273 = scmp.lt.s32.totalorder %s22, 1
      %s274 = scalar_select %p273, %s22, 1
      %p275 = scmp.lt.s32.totalorder %s23, 17
      %s276 = scalar_select %p275, %s23, 17
      %s277 = smul.addr %s276, 3
      %s278 = smul.addr %s274, 54
      %s279 = sadd.s32 %s277, %s278
      %s280 = smul.addr %s279, 4
      %s281 = scalar_lea.vmem %s0, %s280
      %p282 = pneg %p53
      %p283 = pneg %p50
      %s284 = sadd.s32 %s23, 1
      %p285 = scmp.lt.s32.totalorder %s22, 1
      %s286 = scalar_select %p285, %s22, 1
      %p287 = scmp.lt.s32.totalorder %s284, 17
      %s288 = scalar_select %p287, %s284, 17
      %s289 = smul.addr %s288, 3
      %s290 = smul.addr %s286, 54
      %s291 = sadd.s32 %s289, %s290
      %s292 = smul.addr %s291, 4
      %s293 = scalar_lea.vmem %s1, %s292
      %p294 = pneg %p83
      %p295 = pneg %p80
      %s296 = sadd.s32 %s23, 2
      %p297 = scmp.lt.s32.totalorder %s22, 1
      %s298 = scalar_select %p297, %s22, 1
      %p299 = scmp.lt.s32.totalorder %s296, 17
      %s300 = scalar_select %p299, %s296, 17
      %s301 = smul.addr %s300, 3
      %s302 = smul.addr %s298, 54
      %s303 = sadd.s32 %s301, %s302
      %s304 = smul.addr %s303, 4
      %s305 = scalar_lea.vmem %s2, %s304
      %p306 = pneg %p113
      %p307 = pneg %p110
      %p308 = pneg %p134
      %p309 = pneg %p131
      %p310 = pneg %p162
      %p311 = pneg %p159
      %p312 = scmp.lt.s32.totalorder %s22, 1
      %s313 = scalar_select %p312, %s22, 1
      %p314 = scmp.lt.s32.totalorder %s23, 15
      %s315 = scalar_select %p314, %s23, 15
      %s316 = smul.addr %s315, 2
      %s317 = smul.addr %s313, 32
      %s318 = sadd.s32 %s316, %s317
      %s319 = smul.addr %s318, 8
      %s320 = scalar_lea.vmem %s4, %s319
      %p321 = pneg %p183
      %p322 = pneg %p180
      %p323 = pneg %p204
      %p324 = pneg %p201
      %p325 = scmp.lt.s32.totalorder %s22, 1
      %s326 = scalar_select %p325, %s22, 1
      %p327 = scmp.lt.s32.totalorder %s23, 17
      %s328 = scalar_select %p327, %s23, 17
      %s329 = smul.addr %s328, 3
      %s330 = smul.addr %s326, 54
      %s331 = sadd.s32 %s329, %s330
      %s332 = smul.addr %s331, 4
      %s333 = scalar_lea.vmem %s0, %s332
      %s334 = sadd.s32 %s23, 1
      %p335 = scmp.lt.s32.totalorder %s22, 1
      %s336 = scalar_select %p335, %s22, 1
      %p337 = scmp.lt.s32.totalorder %s334, 17
      %s338 = scalar_select %p337, %s334, 17
      %s339 = smul.addr %s338, 3
      %s340 = smul.addr %s336, 54
      %s341 = sadd.s32 %s339, %s340
      %s342 = smul.addr %s341, 4
      %s343 = scalar_lea.vmem %s1, %s342
      %s344 = sadd.s32 %s23, 1
      %s345 = sadd.s32 %s23, 2
      %p346 = scmp.lt.s32.totalorder %s22, 1
      %s347 = scalar_select %p346, %s22, 1
      %p348 = scmp.lt.s32.totalorder %s345, 17
      %s349 = scalar_select %p348, %s345, 17
      %s350 = smul.addr %s349, 3
      %s351 = smul.addr %s347, 54
      %s352 = sadd.s32 %s350, %s351
      %s353 = smul.addr %s352, 4
      %s354 = scalar_lea.vmem %s2, %s353
      %s355 = sadd.s32 %s23, 2
      %p356 = scmp.lt.s32.totalorder %s22, 1
      %s357 = scalar_select %p356, %s22, 1
      %p358 = scmp.lt.s32.totalorder %s23, 15
      %s359 = scalar_select %p358, %s23, 15
      %s360 = smul.addr %s359, 2
      %s361 = smul.addr %s357, 32
      %s362 = sadd.s32 %s360, %s361
      %s363 = smul.addr %s362, 8
      %s364 = scalar_lea.vmem %s4, %s363
      %p366 = scmp.eq.s32.totalorder %s22, 0
      %p367 = scmp.eq.s32.totalorder %s23, 0
      %p368 = pnand %p366, %p367
      %p369 = pneg %p368
      %p370 = scmp.eq.s32.totalorder %s22, 1
      %p371 = scmp.eq.s32.totalorder %s23, 15
      %p372 = pnand %p370, %p371
      %p373 = pneg %p372
      // Predicated region
      $region37: #{double_conv.4} parent=35 // pred_check
        _
      $region38: #{double_conv.4} parent=35 // pred_check_branch
        %375 = sbr.rel (%p368) target = $region40
      $region39: #{double_conv.4} parent=35 // pred_region
        %376 = vst [vmem:[#allocation2] sm:$0x1] 0.0
        %377 = vst [vmem:[#allocation3] sm:$0x1] 0.0
      $region40: #{double_conv.4} parent=35 // pred_fallthru
        _
      %v378 = vld [vmem:[%s333] sm:$0xf]
      %v379 = vld [vmem:[%s333 + $0x4] sm:$0xf]
      %v380 = vld [vmem:[%s333 + $0x8] sm:$0x1]
      %v381 = vunpack.c.l.bf16 %v378
      %v382 = vunpack.c.l.bf16 %v379
      %v383 = vunpack.c.l.bf16 %v380
      %v384 = vld [vmem:[%s343] sm:$0xf]
      %v385 = vld [vmem:[%s343 + $0x4] sm:$0xf]
      %v386 = vld [vmem:[%s343 + $0x8] sm:$0x1]
      %v387 = vunpack.c.l.bf16 %v384
      %v388 = vunpack.c.l.bf16 %v385
      %v389 = vunpack.c.l.bf16 %v386
      %v390 = vld [vmem:[%s354] sm:$0xf]
      %v391 = vld [vmem:[%s354 + $0x4] sm:$0xf]
      %v392 = vld [vmem:[%s354 + $0x8] sm:$0x1]
      %v393 = vunpack.c.l.bf16 %v390
      %v394 = vunpack.c.l.bf16 %v391
      %v395 = vunpack.c.l.bf16 %v392
      %vm399 = vcmask 1046528
      %v400 = vrot.slane %v381, 1
      %v401 = vrot.slane %v382, 1
      %v402 = vsel %vm399, %v400, %v401
      %v403 = vrot.slane %v383, 1
      %v404 = vsel %vm399, %v401, %v403
      %vm407 = vcmask 1045504
      %v408 = vrot.slane %v381, 2
      %v409 = vrot.slane %v382, 2
      %v410 = vsel %vm407, %v408, %v409
      %v411 = vrot.slane %v383, 2
      %v412 = vsel %vm407, %v409, %v411
      %v418 = vrot.slane %v387, 1
      %v419 = vrot.slane %v388, 1
      %v420 = vsel %vm399, %v418, %v419
      %v421 = vrot.slane %v389, 1
      %v422 = vsel %vm399, %v419, %v421
      %v425 = vrot.slane %v387, 2
      %v426 = vrot.slane %v388, 2
      %v427 = vsel %vm407, %v425, %v426
      %v428 = vrot.slane %v389, 2
      %v429 = vsel %vm407, %v426, %v428
      %v435 = vrot.slane %v393, 1
      %v436 = vrot.slane %v394, 1
      %v437 = vsel %vm399, %v435, %v436
      %v438 = vrot.slane %v395, 1
      %v439 = vsel %vm399, %v436, %v438
      %v442 = vrot.slane %v393, 2
      %v443 = vrot.slane %v394, 2
      %v444 = vsel %vm407, %v442, %v443
      %v445 = vrot.slane %v395, 2
      %v446 = vsel %vm407, %v443, %v445
      %v449 = vpack.c.bf16 %v382, %v381
      %v450 = vpack.c.bf16 %v404, %v402
      %v451 = vpack.c.bf16 %v412, %v410
      %v452 = vpack.c.bf16 %v388, %v387
      %v453 = vpack.c.bf16 %v422, %v420
      %v454 = vpack.c.bf16 %v429, %v427
      %v455 = vpack.c.bf16 %v394, %v393
      %v456 = vpack.c.bf16 %v439, %v437
      %v457 = vpack.c.bf16 %v446, %v444
      %v458 = vld [vmem:[%s3] sm:$0xf]
      %v459 = vld [vmem:[%s3 + $0x4] sm:$0xf]
      %v460 = vld [vmem:[%s3 + $0x8] sm:$0xf]
      %v461 = vld [vmem:[%s3 + $0xc] sm:$0xf]
      %v462 = vld [vmem:[%s3 + $0x10] sm:$0xf]
      %v463 = vld [vmem:[%s3 + $0x14] sm:$0xf]
      %v464 = vld [vmem:[%s3 + $0x18] sm:$0xf]
      %v465 = vld [vmem:[%s3 + $0x1c] sm:$0xf]
      %v466 = vld [vmem:[%s3 + $0x20] sm:$0xf]
      %v467 = vld [vmem:[%s3 + $0x24] sm:$0xf]
      %v468 = vld [vmem:[%s3 + $0x28] sm:$0xf]
      %v469 = vld [vmem:[%s3 + $0x2c] sm:$0xf]
      %v470 = vld [vmem:[%s3 + $0x30] sm:$0xf]
      %v471 = vld [vmem:[%s3 + $0x34] sm:$0xf]
      %v472 = vld [vmem:[%s3 + $0x38] sm:$0xf]
      %v473 = vld [vmem:[%s3 + $0x3c] sm:$0xf]
      %v474 = vld [vmem:[%s3 + $0x40] sm:$0xf]
      %v475 = vld [vmem:[%s3 + $0x44] sm:$0xf]
      %v476 = vld [vmem:[%s3 + $0x48] sm:$0xf]
      %v477 = vld [vmem:[%s3 + $0x4c] sm:$0xf]
      %v478 = vld [vmem:[%s3 + $0x50] sm:$0xf]
      %v479 = vld [vmem:[%s3 + $0x54] sm:$0xf]
      %v480 = vld [vmem:[%s3 + $0x58] sm:$0xf]
      %v481 = vld [vmem:[%s3 + $0x5c] sm:$0xf]
      %v482 = vld [vmem:[%s3 + $0x60] sm:$0xf]
      %v483 = vld [vmem:[%s3 + $0x64] sm:$0xf]
      %v484 = vld [vmem:[%s3 + $0x68] sm:$0xf]
      %v485 = vld [vmem:[%s3 + $0x6c] sm:$0xf]
      %v486 = vld [vmem:[%s3 + $0x70] sm:$0xf]
      %v487 = vld [vmem:[%s3 + $0x74] sm:$0xf]
      %v488 = vld [vmem:[%s3 + $0x78] sm:$0xf]
      %v489 = vld [vmem:[%s3 + $0x7c] sm:$0xf]
      %v490 = vld [vmem:[%s3 + $0x80] sm:$0xf]
      %v491 = vld [vmem:[%s3 + $0x84] sm:$0xf]
      %v492 = vld [vmem:[%s3 + $0x88] sm:$0xf]
      %v493 = vld [vmem:[%s3 + $0x8c] sm:$0xf]
      %v494 = vld [vmem:[%s3 + $0x90] sm:$0xf]
      %v495 = vld [vmem:[%s3 + $0x94] sm:$0xf]
      %v496 = vld [vmem:[%s3 + $0x98] sm:$0xf]
      %v497 = vld [vmem:[%s3 + $0x9c] sm:$0xf]
      %v498 = vld [vmem:[%s3 + $0xa0] sm:$0xf]
      %v499 = vld [vmem:[%s3 + $0xa4] sm:$0xf]
      %v500 = vld [vmem:[%s3 + $0xa8] sm:$0xf]
      %v501 = vld [vmem:[%s3 + $0xac] sm:$0xf]
      %v502 = vld [vmem:[%s3 + $0xb0] sm:$0xf]
      %v503 = vld [vmem:[%s3 + $0xb4] sm:$0xf]
      %v504 = vld [vmem:[%s3 + $0xb8] sm:$0xf]
      %v505 = vld [vmem:[%s3 + $0xbc] sm:$0xf]
      %v506 = vld [vmem:[%s3 + $0xc0] sm:$0xf]
      %v507 = vld [vmem:[%s3 + $0xc4] sm:$0xf]
      %v508 = vld [vmem:[%s3 + $0xc8] sm:$0xf]
      %v509 = vld [vmem:[%s3 + $0xcc] sm:$0xf]
      %v510 = vld [vmem:[%s3 + $0xd0] sm:$0xf]
      %v511 = vld [vmem:[%s3 + $0xd4] sm:$0xf]
      %v512 = vld [vmem:[%s3 + $0xd8] sm:$0xf]
      %v513 = vld [vmem:[%s3 + $0xdc] sm:$0xf]
      %v514 = vld [vmem:[%s3 + $0xe0] sm:$0xf]
      %v515 = vld [vmem:[%s3 + $0xe4] sm:$0xf]
      %v516 = vld [vmem:[%s3 + $0xe8] sm:$0xf]
      %v517 = vld [vmem:[%s3 + $0xec] sm:$0xf]
      %v518 = vld [vmem:[%s3 + $0xf0] sm:$0xf]
      %v519 = vld [vmem:[%s3 + $0xf4] sm:$0xf]
      %v520 = vld [vmem:[%s3 + $0xf8] sm:$0xf]
      %v521 = vld [vmem:[%s3 + $0xfc] sm:$0xf]
      %v522 = vld [vmem:[%s3 + $0x100] sm:$0xf]
      %v523 = vld [vmem:[%s3 + $0x104] sm:$0xf]
      %v524 = vld [vmem:[%s3 + $0x108] sm:$0xf]
      %v525 = vld [vmem:[%s3 + $0x10c] sm:$0xf]
      %v526 = vld [vmem:[%s3 + $0x110] sm:$0xf]
      %v527 = vld [vmem:[%s3 + $0x114] sm:$0xf]
      %v528 = vld [vmem:[%s3 + $0x118] sm:$0xf]
      %v529 = vld [vmem:[%s3 + $0x11c] sm:$0xf]
      %v530 = vld [vmem:[%s3 + $0x120] sm:$0xf]
      %v531 = vld [vmem:[%s3 + $0x124] sm:$0xf]
      %v532 = vld [vmem:[%s3 + $0x128] sm:$0xf]
      %v533 = vld [vmem:[%s3 + $0x12c] sm:$0xf]
      %v534 = vld [vmem:[%s3 + $0x130] sm:$0xf]
      %v535 = vld [vmem:[%s3 + $0x134] sm:$0xf]
      %v536 = vld [vmem:[%s3 + $0x138] sm:$0xf]
      %v537 = vld [vmem:[%s3 + $0x13c] sm:$0xf]
      %v538 = vld [vmem:[%s3 + $0x140] sm:$0xf]
      %v539 = vld [vmem:[%s3 + $0x144] sm:$0xf]
      %v540 = vld [vmem:[%s3 + $0x148] sm:$0xf]
      %v541 = vld [vmem:[%s3 + $0x14c] sm:$0xf]
      %v542 = vld [vmem:[%s3 + $0x150] sm:$0xf]
      %v543 = vld [vmem:[%s3 + $0x154] sm:$0xf]
      %v544 = vld [vmem:[%s3 + $0x158] sm:$0xf]
      %v545 = vld [vmem:[%s3 + $0x15c] sm:$0xf]
      %v546 = vld [vmem:[%s3 + $0x160] sm:$0xf]
      %v547 = vld [vmem:[%s3 + $0x164] sm:$0xf]
      %v548 = vld [vmem:[%s3 + $0x168] sm:$0xf]
      %v549 = vld [vmem:[%s3 + $0x16c] sm:$0xf]
      %v550 = vld [vmem:[%s3 + $0x170] sm:$0xf]
      %v551 = vld [vmem:[%s3 + $0x174] sm:$0xf]
      %v552 = vld [vmem:[%s3 + $0x178] sm:$0xf]
      %v553 = vld [vmem:[%s3 + $0x17c] sm:$0xf]
      %v554 = vld [vmem:[%s3 + $0x180] sm:$0xf]
      %v555 = vld [vmem:[%s3 + $0x184] sm:$0xf]
      %v556 = vld [vmem:[%s3 + $0x188] sm:$0xf]
      %v557 = vld [vmem:[%s3 + $0x18c] sm:$0xf]
      %v558 = vld [vmem:[%s3 + $0x190] sm:$0xf]
      %v559 = vld [vmem:[%s3 + $0x194] sm:$0xf]
      %v560 = vld [vmem:[%s3 + $0x198] sm:$0xf]
      %v561 = vld [vmem:[%s3 + $0x19c] sm:$0xf]
      %v562 = vld [vmem:[%s3 + $0x1a0] sm:$0xf]
      %v563 = vld [vmem:[%s3 + $0x1a4] sm:$0xf]
      %v564 = vld [vmem:[%s3 + $0x1a8] sm:$0xf]
      %v565 = vld [vmem:[%s3 + $0x1ac] sm:$0xf]
      %v566 = vld [vmem:[%s3 + $0x1b0] sm:$0xf]
      %v567 = vld [vmem:[%s3 + $0x1b4] sm:$0xf]
      %v568 = vld [vmem:[%s3 + $0x1b8] sm:$0xf]
      %v569 = vld [vmem:[%s3 + $0x1bc] sm:$0xf]
      %v570 = vld [vmem:[%s3 + $0x1c0] sm:$0xf]
      %v571 = vld [vmem:[%s3 + $0x1c4] sm:$0xf]
      %v572 = vld [vmem:[%s3 + $0x1c8] sm:$0xf]
      %v573 = vld [vmem:[%s3 + $0x1cc] sm:$0xf]
      %v574 = vld [vmem:[%s3 + $0x1d0] sm:$0xf]
      %v575 = vld [vmem:[%s3 + $0x1d4] sm:$0xf]
      %v576 = vld [vmem:[%s3 + $0x1d8] sm:$0xf]
      %v577 = vld [vmem:[%s3 + $0x1dc] sm:$0xf]
      %v578 = vld [vmem:[%s3 + $0x1e0] sm:$0xf]
      %v579 = vld [vmem:[%s3 + $0x1e4] sm:$0xf]
      %v580 = vld [vmem:[%s3 + $0x1e8] sm:$0xf]
      %v581 = vld [vmem:[%s3 + $0x1ec] sm:$0xf]
      %v582 = vld [vmem:[%s3 + $0x1f0] sm:$0xf]
      %v583 = vld [vmem:[%s3 + $0x1f4] sm:$0xf]
      %v584 = vld [vmem:[%s3 + $0x1f8] sm:$0xf]
      %v585 = vld [vmem:[%s3 + $0x1fc] sm:$0xf]
      %v586 = vld [vmem:[%s3 + $0x200] sm:$0xf]
      %v587 = vld [vmem:[%s3 + $0x204] sm:$0xf]
      %v588 = vld [vmem:[%s3 + $0x208] sm:$0xf]
      %v589 = vld [vmem:[%s3 + $0x20c] sm:$0xf]
      %v590 = vld [vmem:[%s3 + $0x210] sm:$0xf]
      %v591 = vld [vmem:[%s3 + $0x214] sm:$0xf]
      %v592 = vld [vmem:[%s3 + $0x218] sm:$0xf]
      %v593 = vld [vmem:[%s3 + $0x21c] sm:$0xf]
      %v594 = vld [vmem:[%s3 + $0x220] sm:$0xf]
      %v595 = vld [vmem:[%s3 + $0x224] sm:$0xf]
      %v596 = vld [vmem:[%s3 + $0x228] sm:$0xf]
      %v597 = vld [vmem:[%s3 + $0x22c] sm:$0xf]
      %v598 = vld [vmem:[%s3 + $0x230] sm:$0xf]
      %v599 = vld [vmem:[%s3 + $0x234] sm:$0xf]
      %v600 = vld [vmem:[%s3 + $0x238] sm:$0xf]
      %v601 = vld [vmem:[%s3 + $0x23c] sm:$0xf]
      %v746 = vunpack.c.l.b16 %v458
      %v747 = vunpack.c.l.b16 %v459
      %v748 = vunpack.c.l.b16 %v460
      %v749 = vunpack.c.l.b16 %v461
      %v750 = vunpack.c.l.b16 %v462
      %v751 = vunpack.c.l.b16 %v463
      %v752 = vunpack.c.l.b16 %v464
      %v753 = vunpack.c.l.b16 %v465
      %v754 = vunpack.c.l.b16 %v466
      %v755 = vunpack.c.l.b16 %v467
      %v756 = vunpack.c.l.b16 %v468
      %v757 = vunpack.c.l.b16 %v469
      %v758 = vunpack.c.l.b16 %v470
      %v759 = vunpack.c.l.b16 %v471
      %v760 = vunpack.c.l.b16 %v472
      %v761 = vunpack.c.l.b16 %v473
      %v762 = vunpack.c.l.b16 %v474
      %v763 = vunpack.c.l.b16 %v475
      %v764 = vunpack.c.l.b16 %v476
      %v765 = vunpack.c.l.b16 %v477
      %v766 = vunpack.c.l.b16 %v478
      %v767 = vunpack.c.l.b16 %v479
      %v768 = vunpack.c.l.b16 %v480
      %v769 = vunpack.c.l.b16 %v481
      %v770 = vunpack.c.l.b16 %v482
      %v771 = vunpack.c.l.b16 %v483
      %v772 = vunpack.c.l.b16 %v484
      %v773 = vunpack.c.l.b16 %v485
      %v774 = vunpack.c.l.b16 %v486
      %v775 = vunpack.c.l.b16 %v487
      %v776 = vunpack.c.l.b16 %v488
      %v777 = vunpack.c.l.b16 %v489
      %v778 = vunpack.c.l.b16 %v490
      %v779 = vunpack.c.l.b16 %v491
      %v780 = vunpack.c.l.b16 %v492
      %v781 = vunpack.c.l.b16 %v493
      %v782 = vunpack.c.l.b16 %v494
      %v783 = vunpack.c.l.b16 %v495
      %v784 = vunpack.c.l.b16 %v496
      %v785 = vunpack.c.l.b16 %v497
      %v786 = vunpack.c.l.b16 %v498
      %v787 = vunpack.c.l.b16 %v499
      %v788 = vunpack.c.l.b16 %v500
      %v789 = vunpack.c.l.b16 %v501
      %v790 = vunpack.c.l.b16 %v502
      %v791 = vunpack.c.l.b16 %v503
      %v792 = vunpack.c.l.b16 %v504
      %v793 = vunpack.c.l.b16 %v505
      %v794 = vunpack.c.l.b16 %v506
      %v795 = vunpack.c.l.b16 %v507
      %v796 = vunpack.c.l.b16 %v508
      %v797 = vunpack.c.l.b16 %v509
      %v798 = vunpack.c.l.b16 %v510
      %v799 = vunpack.c.l.b16 %v511
      %v800 = vunpack.c.l.b16 %v512
      %v801 = vunpack.c.l.b16 %v513
      %v802 = vunpack.c.l.b16 %v514
      %v803 = vunpack.c.l.b16 %v515
      %v804 = vunpack.c.l.b16 %v516
      %v805 = vunpack.c.l.b16 %v517
      %v806 = vunpack.c.l.b16 %v518
      %v807 = vunpack.c.l.b16 %v519
      %v808 = vunpack.c.l.b16 %v520
      %v809 = vunpack.c.l.b16 %v521
      %v810 = vunpack.c.l.b16 %v522
      %v811 = vunpack.c.l.b16 %v523
      %v812 = vunpack.c.l.b16 %v524
      %v813 = vunpack.c.l.b16 %v525
      %v814 = vunpack.c.l.b16 %v526
      %v815 = vunpack.c.l.b16 %v527
      %v816 = vunpack.c.l.b16 %v528
      %v817 = vunpack.c.l.b16 %v529
      %v818 = vunpack.c.l.b16 %v530
      %v819 = vunpack.c.l.b16 %v531
      %v820 = vunpack.c.l.b16 %v532
      %v821 = vunpack.c.l.b16 %v533
      %v822 = vunpack.c.l.b16 %v534
      %v823 = vunpack.c.l.b16 %v535
      %v824 = vunpack.c.l.b16 %v536
      %v825 = vunpack.c.l.b16 %v537
      %v826 = vunpack.c.l.b16 %v538
      %v827 = vunpack.c.l.b16 %v539
      %v828 = vunpack.c.l.b16 %v540
      %v829 = vunpack.c.l.b16 %v541
      %v830 = vunpack.c.l.b16 %v542
      %v831 = vunpack.c.l.b16 %v543
      %v832 = vunpack.c.l.b16 %v544
      %v833 = vunpack.c.l.b16 %v545
      %v834 = vunpack.c.l.b16 %v546
      %v835 = vunpack.c.l.b16 %v547
      %v836 = vunpack.c.l.b16 %v548
      %v837 = vunpack.c.l.b16 %v549
      %v838 = vunpack.c.l.b16 %v550
      %v839 = vunpack.c.l.b16 %v551
      %v840 = vunpack.c.l.b16 %v552
      %v841 = vunpack.c.l.b16 %v553
      %v842 = vunpack.c.l.b16 %v554
      %v843 = vunpack.c.l.b16 %v555
      %v844 = vunpack.c.l.b16 %v556
      %v845 = vunpack.c.l.b16 %v557
      %v846 = vunpack.c.l.b16 %v558
      %v847 = vunpack.c.l.b16 %v559
      %v848 = vunpack.c.l.b16 %v560
      %v849 = vunpack.c.l.b16 %v561
      %v850 = vunpack.c.l.b16 %v562
      %v851 = vunpack.c.l.b16 %v563
      %v852 = vunpack.c.l.b16 %v564
      %v853 = vunpack.c.l.b16 %v565
      %v854 = vunpack.c.l.b16 %v566
      %v855 = vunpack.c.l.b16 %v567
      %v856 = vunpack.c.l.b16 %v568
      %v857 = vunpack.c.l.b16 %v569
      %v858 = vunpack.c.l.b16 %v570
      %v859 = vunpack.c.l.b16 %v571
      %v860 = vunpack.c.l.b16 %v572
      %v861 = vunpack.c.l.b16 %v573
      %v862 = vunpack.c.l.b16 %v574
      %v863 = vunpack.c.l.b16 %v575
      %v864 = vunpack.c.l.b16 %v576
      %v865 = vunpack.c.l.b16 %v577
      %v866 = vunpack.c.l.b16 %v578
      %v867 = vunpack.c.l.b16 %v579
      %v868 = vunpack.c.l.b16 %v580
      %v869 = vunpack.c.l.b16 %v581
      %v870 = vunpack.c.l.b16 %v582
      %v871 = vunpack.c.l.b16 %v583
      %v872 = vunpack.c.l.b16 %v584
      %v873 = vunpack.c.l.b16 %v585
      %v874 = vunpack.c.l.b16 %v586
      %v875 = vunpack.c.l.b16 %v587
      %v876 = vunpack.c.l.b16 %v588
      %v877 = vunpack.c.l.b16 %v589
      %v878 = vunpack.c.l.b16 %v590
      %v879 = vunpack.c.l.b16 %v591
      %v880 = vunpack.c.l.b16 %v592
      %v881 = vunpack.c.l.b16 %v593
      %v882 = vunpack.c.l.b16 %v594
      %v883 = vunpack.c.l.b16 %v595
      %v884 = vunpack.c.l.b16 %v596
      %v885 = vunpack.c.l.b16 %v597
      %v886 = vunpack.c.l.b16 %v598
      %v887 = vunpack.c.l.b16 %v599
      %v888 = vunpack.c.l.b16 %v600
      %v889 = vunpack.c.l.b16 %v601
      %v890 = vpack.c.b16 %v747, %v746
      %v891 = vpack.c.b16 %v749, %v748
      %v892 = vpack.c.b16 %v751, %v750
      %v893 = vpack.c.b16 %v753, %v752
      %v894 = vpack.c.b16 %v755, %v754
      %v895 = vpack.c.b16 %v757, %v756
      %v896 = vpack.c.b16 %v759, %v758
      %v897 = vpack.c.b16 %v761, %v760
      %v898 = vpack.c.b16 %v763, %v762
      %v899 = vpack.c.b16 %v765, %v764
      %v900 = vpack.c.b16 %v767, %v766
      %v901 = vpack.c.b16 %v769, %v768
      %v902 = vpack.c.b16 %v771, %v770
      %v903 = vpack.c.b16 %v773, %v772
      %v904 = vpack.c.b16 %v775, %v774
      %v905 = vpack.c.b16 %v777, %v776
      %v906 = vpack.c.b16 %v779, %v778
      %v907 = vpack.c.b16 %v781, %v780
      %v908 = vpack.c.b16 %v783, %v782
      %v909 = vpack.c.b16 %v785, %v784
      %v910 = vpack.c.b16 %v787, %v786
      %v911 = vpack.c.b16 %v789, %v788
      %v912 = vpack.c.b16 %v791, %v790
      %v913 = vpack.c.b16 %v793, %v792
      %v914 = vpack.c.b16 %v795, %v794
      %v915 = vpack.c.b16 %v797, %v796
      %v916 = vpack.c.b16 %v799, %v798
      %v917 = vpack.c.b16 %v801, %v800
      %v918 = vpack.c.b16 %v803, %v802
      %v919 = vpack.c.b16 %v805, %v804
      %v920 = vpack.c.b16 %v807, %v806
      %v921 = vpack.c.b16 %v809, %v808
      %v922 = vpack.c.b16 %v811, %v810
      %v923 = vpack.c.b16 %v813, %v812
      %v924 = vpack.c.b16 %v815, %v814
      %v925 = vpack.c.b16 %v817, %v816
      %v926 = vpack.c.b16 %v819, %v818
      %v927 = vpack.c.b16 %v821, %v820
      %v928 = vpack.c.b16 %v823, %v822
      %v929 = vpack.c.b16 %v825, %v824
      %v930 = vpack.c.b16 %v827, %v826
      %v931 = vpack.c.b16 %v829, %v828
      %v932 = vpack.c.b16 %v831, %v830
      %v933 = vpack.c.b16 %v833, %v832
      %v934 = vpack.c.b16 %v835, %v834
      %v935 = vpack.c.b16 %v837, %v836
      %v936 = vpack.c.b16 %v839, %v838
      %v937 = vpack.c.b16 %v841, %v840
      %v938 = vpack.c.b16 %v843, %v842
      %v939 = vpack.c.b16 %v845, %v844
      %v940 = vpack.c.b16 %v847, %v846
      %v941 = vpack.c.b16 %v849, %v848
      %v942 = vpack.c.b16 %v851, %v850
      %v943 = vpack.c.b16 %v853, %v852
      %v944 = vpack.c.b16 %v855, %v854
      %v945 = vpack.c.b16 %v857, %v856
      %v946 = vpack.c.b16 %v859, %v858
      %v947 = vpack.c.b16 %v861, %v860
      %v948 = vpack.c.b16 %v863, %v862
      %v949 = vpack.c.b16 %v865, %v864
      %v950 = vpack.c.b16 %v867, %v866
      %v951 = vpack.c.b16 %v869, %v868
      %v952 = vpack.c.b16 %v871, %v870
      %v953 = vpack.c.b16 %v873, %v872
      %v954 = vpack.c.b16 %v875, %v874
      %v955 = vpack.c.b16 %v877, %v876
      %v956 = vpack.c.b16 %v879, %v878
      %v957 = vpack.c.b16 %v881, %v880
      %v958 = vpack.c.b16 %v883, %v882
      %v959 = vpack.c.b16 %v885, %v884
      %v960 = vpack.c.b16 %v887, %v886
      %v961 = vpack.c.b16 %v889, %v888
      %1034 = vmatprep.subr.bf16.mxu0 0
      %1035 = vmatpush1.bf16.msra.mxu0 %v897
      %1036 = vmatprep.subr.bf16.mxu0 0
      %1037 = vmatpush1.bf16.msra.mxu0 %v896
      %1038 = vmatprep.subr.bf16.mxu0 0
      %1039 = vmatpush1.bf16.msra.mxu0 %v895
      %1040 = vmatprep.subr.bf16.mxu0 0
      %1041 = vmatpush1.bf16.msra.mxu0 %v894
      %1042 = vmatprep.subr.bf16.mxu0 0
      %1043 = vmatpush1.bf16.msra.mxu0 %v893
      %1044 = vmatprep.subr.bf16.mxu0 0
      %1045 = vmatpush1.bf16.msra.mxu0 %v892
      %1046 = vmatprep.subr.bf16.mxu0 0
      %1047 = vmatpush1.bf16.msra.mxu0 %v891
      %1048 = vmatprep.subr.bf16.mxu0 0
      %1049 = vmatpush1.bf16.msra.mxu0 %v890
      %1050 = vmatprep.subr.bf16.mxu0 0
      %1051 = vmatpush2.bf16.msra.mxu0 %v905
      %1052 = vmatprep.subr.bf16.mxu0 0
      %1053 = vmatpush2.bf16.msra.mxu0 %v904
      %1054 = vmatprep.subr.bf16.mxu0 0
      %1055 = vmatpush2.bf16.msra.mxu0 %v903
      %1056 = vmatprep.subr.bf16.mxu0 0
      %1057 = vmatpush2.bf16.msra.mxu0 %v902
      %1058 = vmatprep.subr.bf16.mxu0 0
      %1059 = vmatpush2.bf16.msra.mxu0 %v901
      %1060 = vmatprep.subr.bf16.mxu0 0
      %1061 = vmatpush2.bf16.msra.mxu0 %v900
      %1062 = vmatprep.subr.bf16.mxu0 0
      %1063 = vmatpush2.bf16.msra.mxu0 %v899
      %1064 = vmatprep.subr.bf16.mxu0 0
      %1065 = vmatpush2.bf16.msra.mxu0 %v898
      %1066 = vmatprep.mubr.bf16.mxu0 %v450
      %1067 = vmatmul.mubr.bf16.gmra.mxu0 %v449
      %v1068 = vpop.f32.mrf.mxu0
      %v1069 = vadd.f32 0.0, %v1068
      %v1070 = vpop.f32.mrf.mxu0
      %v1071 = vpop.f32.mrf.mxu0
      %v1072 = vadd.f32 0.0, %v1071
      %v1073 = vpop.f32.mrf.mxu0
      %1074 = vdwg.mxu0
      %1075 = vmatprep.subr.bf16.mxu0 0
      %1076 = vmatpush1.bf16.msra.mxu0 %v913
      %1077 = vmatprep.subr.bf16.mxu0 0
      %1078 = vmatpush1.bf16.msra.mxu0 %v912
      %1079 = vmatprep.subr.bf16.mxu0 0
      %1080 = vmatpush1.bf16.msra.mxu0 %v911
      %1081 = vmatprep.subr.bf16.mxu0 0
      %1082 = vmatpush1.bf16.msra.mxu0 %v910
      %1083 = vmatprep.subr.bf16.mxu0 0
      %1084 = vmatpush1.bf16.msra.mxu0 %v909
      %1085 = vmatprep.subr.bf16.mxu0 0
      %1086 = vmatpush1.bf16.msra.mxu0 %v908
      %1087 = vmatprep.subr.bf16.mxu0 0
      %1088 = vmatpush1.bf16.msra.mxu0 %v907
      %1089 = vmatprep.subr.bf16.mxu0 0
      %1090 = vmatpush1.bf16.msra.mxu0 %v906
      %1091 = vmatprep.subr.bf16.mxu0 0
      %1092 = vmatpush2.bf16.msra.mxu0 %v921
      %1093 = vmatprep.subr.bf16.mxu0 0
      %1094 = vmatpush2.bf16.msra.mxu0 %v920
      %1095 = vmatprep.subr.bf16.mxu0 0
      %1096 = vmatpush2.bf16.msra.mxu0 %v919
      %1097 = vmatprep.subr.bf16.mxu0 0
      %1098 = vmatpush2.bf16.msra.mxu0 %v918
      %1099 = vmatprep.subr.bf16.mxu0 0
      %1100 = vmatpush2.bf16.msra.mxu0 %v917
      %1101 = vmatprep.subr.bf16.mxu0 0
      %1102 = vmatpush2.bf16.msra.mxu0 %v916
      %1103 = vmatprep.subr.bf16.mxu0 0
      %1104 = vmatpush2.bf16.msra.mxu0 %v915
      %1105 = vmatprep.subr.bf16.mxu0 0
      %1106 = vmatpush2.bf16.msra.mxu0 %v914
      %1107 = vmatprep.mubr.bf16.mxu0 %v452
      %1108 = vmatmul.mubr.bf16.gmra.mxu0 %v451
      %v1109 = vpop.f32.mrf.mxu0
      %v1110 = vadd.f32 %v1069, %v1109
      %v1111 = vpop.f32.mrf.mxu0
      %v1112 = vpop.f32.mrf.mxu0
      %v1113 = vadd.f32 %v1072, %v1112
      %v1114 = vpop.f32.mrf.mxu0
      %1115 = vdwg.mxu0
      %1116 = vmatprep.subr.bf16.mxu0 0
      %1117 = vmatpush1.bf16.msra.mxu0 %v929
      %1118 = vmatprep.subr.bf16.mxu0 0
      %1119 = vmatpush1.bf16.msra.mxu0 %v928
      %1120 = vmatprep.subr.bf16.mxu0 0
      %1121 = vmatpush1.bf16.msra.mxu0 %v927
      %1122 = vmatprep.subr.bf16.mxu0 0
      %1123 = vmatpush1.bf16.msra.mxu0 %v926
      %1124 = vmatprep.subr.bf16.mxu0 0
      %1125 = vmatpush1.bf16.msra.mxu0 %v925
      %1126 = vmatprep.subr.bf16.mxu0 0
      %1127 = vmatpush1.bf16.msra.mxu0 %v924
      %1128 = vmatprep.subr.bf16.mxu0 0
      %1129 = vmatpush1.bf16.msra.mxu0 %v923
      %1130 = vmatprep.subr.bf16.mxu0 0
      %1131 = vmatpush1.bf16.msra.mxu0 %v922
      %1132 = vmatprep.subr.bf16.mxu0 0
      %1133 = vmatpush2.bf16.msra.mxu0 %v937
      %1134 = vmatprep.subr.bf16.mxu0 0
      %1135 = vmatpush2.bf16.msra.mxu0 %v936
      %1136 = vmatprep.subr.bf16.mxu0 0
      %1137 = vmatpush2.bf16.msra.mxu0 %v935
      %1138 = vmatprep.subr.bf16.mxu0 0
      %1139 = vmatpush2.bf16.msra.mxu0 %v934
      %1140 = vmatprep.subr.bf16.mxu0 0
      %1141 = vmatpush2.bf16.msra.mxu0 %v933
      %1142 = vmatprep.subr.bf16.mxu0 0
      %1143 = vmatpush2.bf16.msra.mxu0 %v932
      %1144 = vmatprep.subr.bf16.mxu0 0
      %1145 = vmatpush2.bf16.msra.mxu0 %v931
      %1146 = vmatprep.subr.bf16.mxu0 0
      %1147 = vmatpush2.bf16.msra.mxu0 %v930
      %1148 = vmatprep.mubr.bf16.mxu0 %v454
      %1149 = vmatmul.mubr.bf16.gmra.mxu0 %v453
      %v1150 = vpop.f32.mrf.mxu0
      %v1151 = vadd.f32 %v1110, %v1150
      %v1152 = vpop.f32.mrf.mxu0
      %v1153 = vpop.f32.mrf.mxu0
      %v1154 = vadd.f32 %v1113, %v1153
      %v1155 = vpop.f32.mrf.mxu0
      %1156 = vdwg.mxu0
      %1157 = vmatprep.subr.bf16.mxu0 0
      %1158 = vmatpush1.bf16.msra.mxu0 %v945
      %1159 = vmatprep.subr.bf16.mxu0 0
      %1160 = vmatpush1.bf16.msra.mxu0 %v944
      %1161 = vmatprep.subr.bf16.mxu0 0
      %1162 = vmatpush1.bf16.msra.mxu0 %v943
      %1163 = vmatprep.subr.bf16.mxu0 0
      %1164 = vmatpush1.bf16.msra.mxu0 %v942
      %1165 = vmatprep.subr.bf16.mxu0 0
      %1166 = vmatpush1.bf16.msra.mxu0 %v941
      %1167 = vmatprep.subr.bf16.mxu0 0
      %1168 = vmatpush1.bf16.msra.mxu0 %v940
      %1169 = vmatprep.subr.bf16.mxu0 0
      %1170 = vmatpush1.bf16.msra.mxu0 %v939
      %1171 = vmatprep.subr.bf16.mxu0 0
      %1172 = vmatpush1.bf16.msra.mxu0 %v938
      %1173 = vmatprep.subr.bf16.mxu0 0
      %1174 = vmatpush2.bf16.msra.mxu0 %v953
      %1175 = vmatprep.subr.bf16.mxu0 0
      %1176 = vmatpush2.bf16.msra.mxu0 %v952
      %1177 = vmatprep.subr.bf16.mxu0 0
      %1178 = vmatpush2.bf16.msra.mxu0 %v951
      %1179 = vmatprep.subr.bf16.mxu0 0
      %1180 = vmatpush2.bf16.msra.mxu0 %v950
      %1181 = vmatprep.subr.bf16.mxu0 0
      %1182 = vmatpush2.bf16.msra.mxu0 %v949
      %1183 = vmatprep.subr.bf16.mxu0 0
      %1184 = vmatpush2.bf16.msra.mxu0 %v948
      %1185 = vmatprep.subr.bf16.mxu0 0
      %1186 = vmatpush2.bf16.msra.mxu0 %v947
      %1187 = vmatprep.subr.bf16.mxu0 0
      %1188 = vmatpush2.bf16.msra.mxu0 %v946
      %1189 = vmatprep.mubr.bf16.mxu0 %v456
      %1190 = vmatmul.mubr.bf16.gmra.mxu0 %v455
      %v1191 = vpop.f32.mrf.mxu0
      %v1192 = vadd.f32 %v1151, %v1191
      %v1193 = vpop.f32.mrf.mxu0
      %v1194 = vpop.f32.mrf.mxu0
      %v1195 = vadd.f32 %v1154, %v1194
      %v1196 = vpop.f32.mrf.mxu0
      %1197 = vdwg.mxu0
      %1198 = vmatprep.subr.bf16.mxu0 0
      %1199 = vmatpush1.bf16.msra.mxu0 %v961
      %1200 = vmatprep.subr.bf16.mxu0 0
      %1201 = vmatpush1.bf16.msra.mxu0 %v960
      %1202 = vmatprep.subr.bf16.mxu0 0
      %1203 = vmatpush1.bf16.msra.mxu0 %v959
      %1204 = vmatprep.subr.bf16.mxu0 0
      %1205 = vmatpush1.bf16.msra.mxu0 %v958
      %1206 = vmatprep.subr.bf16.mxu0 0
      %1207 = vmatpush1.bf16.msra.mxu0 %v957
      %1208 = vmatprep.subr.bf16.mxu0 0
      %1209 = vmatpush1.bf16.msra.mxu0 %v956
      %1210 = vmatprep.subr.bf16.mxu0 0
      %1211 = vmatpush1.bf16.msra.mxu0 %v955
      %1212 = vmatprep.subr.bf16.mxu0 0
      %1213 = vmatpush1.bf16.msra.mxu0 %v954
      %1214 = vmatprep.subr.bf16.mxu0 0
      %1215 = vmatpush2.bf16.msra.mxu0 0
      %1216 = vmatprep.subr.bf16.mxu0 0
      %1217 = vmatpush2.bf16.msra.mxu0 0
      %1218 = vmatprep.subr.bf16.mxu0 0
      %1219 = vmatpush2.bf16.msra.mxu0 0
      %1220 = vmatprep.subr.bf16.mxu0 0
      %1221 = vmatpush2.bf16.msra.mxu0 0
      %1222 = vmatprep.subr.bf16.mxu0 0
      %1223 = vmatpush2.bf16.msra.mxu0 0
      %1224 = vmatprep.subr.bf16.mxu0 0
      %1225 = vmatpush2.bf16.msra.mxu0 0
      %1226 = vmatprep.subr.bf16.mxu0 0
      %1227 = vmatpush2.bf16.msra.mxu0 0
      %1228 = vmatprep.subr.bf16.mxu0 0
      %1229 = vmatpush2.bf16.msra.mxu0 0
      %1230 = vmatprep.mubr.bf16.mxu0 0
      %1231 = vmatmul.mubr.bf16.gmra.mxu0 %v457
      %v1232 = vpop.f32.mrf.mxu0
      %v1233 = vadd.f32 %v1192, %v1232
      %v1234 = vpop.f32.mrf.mxu0
      %v1235 = vpop.f32.mrf.mxu0
      %v1236 = vadd.f32 %v1195, %v1235
      %v1237 = vpop.f32.mrf.mxu0
      %1238 = vdwg.mxu0
      %1239 = vst [vmem:[%s364] sm:$0xff] %v1233
      %1240 = vst [vmem:[%s364 + $0x8] sm:$0xff] %v1236
      %v1241 = vld [vmem:[#allocation2] sm:$0x1]
      %v1242 = vadd.f32 %v1233, %v1236
      %v1243 = vrot.slane %v1242, 4
      %v1244 = vadd.f32 %v1242, %v1243
      %v1245 = vrot.slane %v1244, 2
      %v1246 = vadd.f32 %v1244, %v1245
      %v1247 = vrot.slane %v1246, 1
      %v1248 = vadd.f32 %v1246, %v1247
      %v1249 = vadd.f32 %v1241, %v1248
      %1250 = vst [vmem:[#allocation2] sm:$0x1] %v1249
      %v1251 = vld [vmem:[#allocation3] sm:$0x1]
      %v1252 = vmul.f32 %v1233, %v1233
      %v1253 = vmul.f32 %v1236, %v1236
      %v1254 = vadd.f32 %v1252, %v1253
      %v1255 = vrot.slane %v1254, 4
      %v1256 = vadd.f32 %v1254, %v1255
      %v1257 = vrot.slane %v1256, 2
      %v1258 = vadd.f32 %v1256, %v1257
      %v1259 = vrot.slane %v1258, 1
      %v1260 = vadd.f32 %v1258, %v1259
      %v1261 = vadd.f32 %v1251, %v1260
      %1262 = vst [vmem:[#allocation3] sm:$0x1] %v1261
      // Predicated region
      $region41: #{double_conv.4} parent=35 // pred_check
        _
      $region42: #{double_conv.4} parent=35 // pred_check_branch
        %1264 = sbr.rel (%p372) target = $region44
      $region43: #{double_conv.4} parent=35 // pred_region
        %v1265 = vld [vmem:[#allocation2] sm:$0x1]
        %1266 = vst [vmem:[%s5] sm:$0x1] %v1265
        %v1267 = vld [vmem:[#allocation3] sm:$0x1]
        %1268 = vst [vmem:[%s6] sm:$0x1] %v1267
      $region44: #{double_conv.4} parent=35 // pred_fallthru
        _
      %p1269 = scmp.lt.s32.totalorder %s22, 1
      %s1270 = scalar_select %p1269, %s22, 1
      %p1271 = scmp.lt.s32.totalorder %s23, 15
      %s1272 = scalar_select %p1271, %s23, 15
      %s1273 = smul.addr %s1272, 2
      %s1274 = smul.addr %s1270, 32
      %s1275 = sadd.s32 %s1273, %s1274
      %s1276 = smul.addr %s1275, 8
      %s1277 = scalar_lea.vmem %s4, %s1276
      // Predicated region
      $region45: #{double_conv.4} parent=35 // pred_check
        %p1278 = pneg %p159
      $region46: #{double_conv.4} parent=35 // pred_check_branch
        %1280 = sbr.rel (%p1278) target = $region48
      $region47: #{double_conv.4} parent=35 // pred_region
        _
      $region48: #{double_conv.4} parent=35 // pred_fallthru
        _
      // Predicated region
      $region49: #{double_conv.4} parent=35 // pred_check
        %p1281 = pneg %p180
      $region50: #{double_conv.4} parent=35 // pred_check_branch
        %1283 = sbr.rel (%p1281) target = $region52
      $region51: #{double_conv.4} parent=35 // pred_region
        _
      $region52: #{double_conv.4} parent=35 // pred_fallthru
        _
      // Predicated region
      $region53: #{double_conv.4} parent=35 // pred_check
        %p1284 = pneg %p201
      $region54: #{double_conv.4} parent=35 // pred_check_branch
        %1286 = sbr.rel (%p1284) target = $region56
      $region55: #{double_conv.4} parent=35 // pred_region
        _
      $region56: #{double_conv.4} parent=35 // pred_fallthru
        _
      // Predicated region
      $region57: #{double_conv.4} parent=35 // pred_check
        %p1287 = pneg %p180
      $region58: #{double_conv.4} parent=35 // pred_check_branch
        %1289 = sbr.rel (%p1287) target = $region60
      $region59: #{double_conv.4} parent=35 // pred_region
        _
      $region60: #{double_conv.4} parent=35 // pred_fallthru
        _
      // Predicated region
      $region61: #{double_conv.4} parent=35 // pred_check
        %p1290 = pneg %p201
      $region62: #{double_conv.4} parent=35 // pred_check_branch
        %1292 = sbr.rel (%p1290) target = $region64
      $region63: #{double_conv.4} parent=35 // pred_region
        _
      $region64: #{double_conv.4} parent=35 // pred_fallthru
        _
    $region36: #{double_conv.4} parent=5 // pred_fallthru
      _
    %p1293 = scmp.le.s32.totalorder 2, %s13
    // Predicated region
    $region65: #{double_conv.4} parent=5 // pred_check
      %p1294 = pneg %p1293
    $region66: #{double_conv.4} parent=5 // pred_check_branch
      %1296 = sbr.rel (%p1294) target = $region68
    $region67: #{double_conv.4} parent=5 // pred_region
      %s1297 = ssub.s32 %s13, 2
      // Predicated region
      $region69: #{double_conv.4} parent=67 // pred_check
        %p1298 = pneg %p165
      $region70: #{double_conv.4} parent=67 // pred_check_branch
        %1300 = sbr.rel (%p1298) target = $region72
      $region71: #{double_conv.4} parent=67 // pred_region
        %p1301 = scmp.lt.s32.totalorder %s24, 1
        %s1302 = scalar_select %p1301, %s24, 1
        %p1303 = scmp.lt.s32.totalorder %s25, 15
        %s1304 = scalar_select %p1303, %s25, 15
        %s1305 = smul.addr %s1304, 2
        %s1306 = smul.addr %s1302, 32
        %s1307 = sadd.s32 %s1305, %s1306
        %s1308 = smul.addr %s1307, 8
        %s1309 = scalar_lea.vmem %s4, %s1308
      $region72: #{double_conv.4} parent=67 // pred_fallthru
        _
    $region68: #{double_conv.4} parent=5 // pred_fallthru
      _
  $region6: #{double_conv.4} parent=0 // loop_footer
    %s17 = sadd.s32 1, %s13
  $region7: #{double_conv.4} parent=0 // loop_footer_branch
    %12 = sbr.rel target = $region3
  $region8: #{double_conv.4} parent=0 // loop_exit
    _

</llo_original>
